<compile_context>
chip_gen: v7x
topology: tpu7x:2x2x1
jax: 0.10.0
libtpu: 0.0.40
codegen_flags: <defaults>
</compile_context>

<pallas_src>
import math
import functools

import numpy as np
import jax
import jax.numpy as jnp
from jax.experimental import pallas as pl
from jax.experimental.pallas import tpu as pltpu


def _round_up(x, m):
    return ((x + m - 1) // m) * m


def _mha_kernel(q_ref, h_ref, wq_ref, wk_ref, wv_ref, wo_ref, o_ref,
                k_cache, v_cache, heads_scr,
                *, n_heads, key_dim, val_dim, valid_g, approx_recip):
    # q_ref:    (Bb, Tq, D)        compute dtype (bf16 or f32)
    # h_ref:    (Bb, Gp, D)
    # wq_ref:   (D, HKp)           per-head query proj (norm_factor pre-folded)
    # wk_ref:   (D, HKp)
    # wv_ref:   (D, HVp)
    # wo_ref:   (H*Vd, Ep)         lane-padded output projection
    # o_ref:    (Bb, Tq, Ep)
    # k_cache:  (Bb, Gp, HKp)      VMEM scratch, filled once per batch block
    # v_cache:  (Bb, Gp, HVp)      VMEM scratch, filled once per batch block
    # heads_scr:(Bb, Tq, H*Vd)     VMEM scratch accumulating head outputs
    Bb, Tq, D = q_ref.shape
    Gp = h_ref.shape[1]
    H, Kd, Vd = n_heads, key_dim, val_dim
    cdt = q_ref.dtype

    # --- K/V projections: once per batch block, cached across q tiles -------
    @pl.when(pl.program_id(1) == 0)
    def _():
        hf = h_ref[...].reshape(Bb * Gp, D)
        k = jnp.dot(hf, wk_ref[...], preferred_element_type=jnp.float32)
        v = jnp.dot(hf, wv_ref[...], preferred_element_type=jnp.float32)
        k_cache[...] = k.astype(cdt).reshape(Bb, Gp, -1)
        v_cache[...] = v.astype(cdt).reshape(Bb, Gp, -1)

    # --- Q projection for this (batch, q) tile: one wide MXU matmul ---------
    qf = q_ref[...].reshape(Bb * Tq, D)
    q_all = jnp.dot(qf, wq_ref[...], preferred_element_type=jnp.float32)
    q_all = q_all.astype(cdt).reshape(Bb, Tq, -1)

    # Additive bias masking padded key columns (emitted only if G was padded).
    if valid_g != Gp:
        g_idx = jax.lax.broadcasted_iota(jnp.int32, (Tq, Gp), 1)
        key_bias = jnp.where(g_idx < valid_g, 0.0, -1e30).astype(jnp.float32)
        key_bias = key_bias[None, :, :]                    # (1, Tq, Gp), hoisted
    else:
        key_bias = None

    # --- per-head scores / softmax / attn@V (H small & static -> unrolled) --
    # TODO(synk): if bundle dumps show this EUP/VPU-bound at small Kd, batch the
    #             heads into a single multi-batch dot_general instead.
    for hd in range(H):
        q_h = q_all[:, :, hd * Kd:(hd + 1) * Kd]           # (Bb, Tq, Kd)
        k_h = k_cache[:, :, hd * Kd:(hd + 1) * Kd]         # (Bb, Gp, Kd)
        v_h = v_cache[:, :, hd * Vd:(hd + 1) * Vd]         # (Bb, Gp, Vd)

        # norm_factor already folded into wq; contraction on the last dims of
        # both operands -> no explicit K transpose.
        s = jnp.einsum('bqk,bgk->bqg', q_h, k_h,
                       preferred_element_type=jnp.float32)
        if key_bias is not None:
            s = s + key_bias
        s = s - jnp.max(s, axis=-1, keepdims=True)
        e = jnp.exp(s)
        attn = e * pl.reciprocal(jnp.sum(e, axis=-1, keepdims=True),
                                 approx=approx_recip)
        hv = jnp.einsum('bqg,bgv->bqv', attn.astype(cdt), v_h,
                        preferred_element_type=jnp.float32)
        heads_scr[:, :, hd * Vd:(hd + 1) * Vd] = hv.astype(cdt)

    # --- fused output projection: (Bb*Tq, H*Vd) @ (H*Vd, Ep) -----------------
    heads = heads_scr[...].reshape(Bb * Tq, H * Vd)
    out = jnp.dot(heads, wo_ref[...], preferred_element_type=jnp.float32)
    o_ref[...] = out.reshape(Bb, Tq, -1).astype(o_ref.dtype)


def multi_head_attention(q, h, w_query, w_key, w_val, w_out,
                         *, compute_dtype=jnp.bfloat16, block_q_max=256,
                         vmem_budget_bytes=40 * 1024 * 1024):
    """Pallas MultiHeadAttention forward (mask=None)."""
    # TODO(synk): mask path (compatibility[mask] = -inf, attn[mask] = 0) not implemented.
    # TODO(synk): for very large graph_size, add a flash-style online-softmax loop over
    #             G tiles so the f32 scores never exceed a fixed VMEM tile.
    # TODO(synk): consider pipeline_mode=pl.Buffered(1) on the resident weight specs
    #             (skip their double-buffering) once verified on-target; and an explicit
    #             pl.core_map split if profiling on v7x shows one TensorCore idle.
    B, Nq, D = q.shape
    _, G, _ = h.shape
    H, _, Kd = w_query.shape
    Vd = w_val.shape[-1]
    E = w_out.shape[-1]
    norm_factor = 1.0 / math.sqrt(Kd)

    cbytes = np.dtype(compute_dtype).itemsize
    obytes = np.dtype(q.dtype).itemsize
    sub = 16 if cbytes == 2 else 8                 # sublane multiple (dtype packing)

    # --- padded geometry ------------------------------------------------------
    block_q = min(_round_up(Nq, sub), block_q_max)
    Nq_pad = _round_up(Nq, block_q)
    G_pad = _round_up(G, sub)
    HK, HV = H * Kd, H * Vd
    HK_pad = _round_up(HK, 128)                    # lane-dense projection outputs
    HV_pad = _round_up(HV, 128)
    E_pad = _round_up(E, 128)                      # lane-dense output store

    def vmem_bytes(bb):
        act = 2 * bb * (block_q + G_pad) * D * cbytes            # double-buffered inputs
        out = 2 * bb * block_q * E_pad * obytes                  # double-buffered output
        wgt = 2 * (2 * D * HK_pad + D * HV_pad + HV * E_pad) * cbytes
        scr = bb * (G_pad * (HK_pad + HV_pad) + block_q * HV) * cbytes
        wrk = 6 * bb * block_q * max(G_pad, HK_pad) * 4          # f32 scores/exp/q working set
        return act + out + wgt + scr + wrk

    # Grow the batch block until ~512 matmul rows per step or the VMEM budget.
    block_b = 1
    while (block_b < B and block_b * block_q < 512
           and vmem_bytes(block_b * 2) <= vmem_budget_bytes):
        block_b = min(block_b * 2, B)
    B_pad = _round_up(B, block_b)

    # --- fused / padded weight layouts (one-time, wrapper-side) --------------
    # column (hd, k) of wq_all is W_query[hd, :, k]  =>  q @ wq_all == per-head Q concat.
    wq_all = jnp.transpose(w_query, (1, 0, 2)).reshape(D, HK) * norm_factor
    wq_all = jnp.pad(wq_all, ((0, 0), (0, HK_pad - HK))).astype(compute_dtype)
    wk_all = jnp.pad(jnp.transpose(w_key, (1, 0, 2)).reshape(D, HK),
                     ((0, 0), (0, HK_pad - HK))).astype(compute_dtype)
    wv_all = jnp.pad(jnp.transpose(w_val, (1, 0, 2)).reshape(D, HV),
                     ((0, 0), (0, HV_pad - HV))).astype(compute_dtype)
    wo_pad = jnp.pad(w_out.reshape(HV, E),                 # matches W_out.view(H*Vd, E)
                     ((0, 0), (0, E_pad - E))).astype(compute_dtype)

    qc = jnp.pad(q, ((0, B_pad - B), (0, Nq_pad - Nq), (0, 0))).astype(compute_dtype)
    hc = jnp.pad(h, ((0, B_pad - B), (0, G_pad - G), (0, 0))).astype(compute_dtype)

    kernel = functools.partial(
        _mha_kernel, n_heads=H, key_dim=Kd, val_dim=Vd, valid_g=G,
        approx_recip=(cbytes == 2))

    grid = (B_pad // block_b, Nq_pad // block_q)

    flops = 2 * B_pad * (Nq_pad * D * HK_pad + G_pad * D * (HK_pad + HV_pad)
                         + H * Nq_pad * G_pad * (Kd + Vd) + Nq_pad * HV * E_pad)
    bytes_accessed = (cbytes * (B_pad * Nq_pad * D + B_pad * G_pad * D
                                + 2 * D * HK_pad + D * HV_pad + HV * E_pad)
                      + obytes * B_pad * Nq_pad * E_pad)
    cost = pl.CostEstimate(flops=flops, transcendentals=B_pad * H * Nq_pad * G_pad,
                           bytes_accessed=bytes_accessed)

    vmem_limit = int(min(64 << 20, max(32 << 20, 2 * vmem_bytes(block_b))))

    out_pad = pl.pallas_call(
        kernel,
        out_shape=jax.ShapeDtypeStruct((B_pad, Nq_pad, E_pad), q.dtype),
        grid_spec=pltpu.PrefetchScalarGridSpec(
            num_scalar_prefetch=0,
            grid=grid,
            in_specs=[
                pl.BlockSpec((block_b, block_q, D), lambda b, qi: (b, qi, 0)),
                pl.BlockSpec((block_b, G_pad, D), lambda b, qi: (b, 0, 0)),
                pl.BlockSpec((D, HK_pad), lambda b, qi: (0, 0)),    # resident weights
                pl.BlockSpec((D, HK_pad), lambda b, qi: (0, 0)),
                pl.BlockSpec((D, HV_pad), lambda b, qi: (0, 0)),
                pl.BlockSpec((HV, E_pad), lambda b, qi: (0, 0)),
            ],
            out_specs=pl.BlockSpec((block_b, block_q, E_pad),
                                   lambda b, qi: (b, qi, 0)),
            scratch_shapes=[
                pltpu.VMEM((block_b, G_pad, HK_pad), compute_dtype),   # K cache
                pltpu.VMEM((block_b, G_pad, HV_pad), compute_dtype),   # V cache
                pltpu.VMEM((block_b, block_q, HV), compute_dtype),     # head outputs
            ],
        ),
        compiler_params=pltpu.CompilerParams(
            dimension_semantics=("parallel", "arbitrary"),
            vmem_limit_bytes=vmem_limit),
        cost_estimate=cost,
    )(qc, hc, wq_all, wk_all, wv_all, wo_pad)

    return out_pad[:B, :Nq, :E]


def _reference(q, h, w_query, w_key, w_val, w_out):
    """Pure-JAX reference mirroring the PyTorch forward (mask=None)."""
    Kd = w_query.shape[-1]
    norm = 1.0 / math.sqrt(Kd)
    Q = jnp.einsum('bqd,hdk->hbqk', q, w_query)
    K = jnp.einsum('bgd,hdk->hbgk', h, w_key)
    V = jnp.einsum('bgd,hdv->hbgv', h, w_val)
    compat = norm * jnp.einsum('hbqk,hbgk->hbqg', Q, K)
    attn = jax.nn.softmax(compat, axis=-1)
    heads = jnp.einsum('hbqg,hbgv->hbqv', attn, V)
    out = jnp.einsum('hbqv,hve->bqe', heads, w_out)
    return out


if __name__ == "__main__":
    # Small config consistent with the module:
    n_heads = 4
    input_dim = 16
    embed_dim = 32
    key_dim = val_dim = embed_dim // n_heads   # 8
    batch_size, n_query, graph_size = 2, 8, 8

    key = jax.random.PRNGKey(0)
    k_q, k_h, k_wq, k_wk, k_wv, k_wo = jax.random.split(key, 6)

    # uniform(-stdv, stdv), stdv = 1/sqrt(last dim), matching init_parameters().
    def uniform_init(k, shape):
        stdv = 1.0 / math.sqrt(shape[-1])
        return jax.random.uniform(k, shape, jnp.float32, minval=-stdv, maxval=stdv)

    W_query = uniform_init(k_wq, (n_heads, input_dim, key_dim))
    W_key = uniform_init(k_wk, (n_heads, input_dim, key_dim))
    W_val = uniform_init(k_wv, (n_heads, input_dim, val_dim))
    W_out = uniform_init(k_wo, (n_heads, val_dim, embed_dim))

    q = jax.random.normal(k_q, (batch_size, n_query, input_dim), jnp.float32)
    h = jax.random.normal(k_h, (batch_size, graph_size, input_dim), jnp.float32)

    ref = _reference(q, h, W_query, W_key, W_val, W_out)

    # f32 compute path: tight check vs reference (no seq padding, exact recip).
    out_f32 = multi_head_attention(q, h, W_query, W_key, W_val, W_out,
                                   compute_dtype=jnp.float32)
    out_f32 = jax.block_until_ready(out_f32)
    assert out_f32.shape == (batch_size, n_query, embed_dim)
    assert jnp.allclose(out_f32, ref, atol=1e-4, rtol=1e-4), "f32 mismatch vs reference"

    # bf16 MXU path (default fast path; exercises seq padding + key masking).
    out_bf16 = multi_head_attention(q, h, W_query, W_key, W_val, W_out)
    out_bf16 = jax.block_until_ready(out_bf16)
    assert out_bf16.shape == (batch_size, n_query, embed_dim)
    assert jnp.allclose(out_bf16, ref, atol=5e-2, rtol=5e-2), "bf16 mismatch vs reference"

    print("KERNEL_OK")
</pallas_src>

<mosaic_0001>
module attributes {stable_mosaic.version = 11 : i64} {
  func.func @_mha_kernel(%arg0: i32, %arg1: i32, %arg2: memref<2x8x16xf32, #tpu.memory_space<vmem>>, %arg3: memref<2x8x16xf32, #tpu.memory_space<vmem>>, %arg4: memref<16x128xf32, #tpu.memory_space<vmem>>, %arg5: memref<16x128xf32, #tpu.memory_space<vmem>>, %arg6: memref<16x128xf32, #tpu.memory_space<vmem>>, %arg7: memref<32x128xf32, #tpu.memory_space<vmem>>, %arg8: memref<2x8x128xf32, #tpu.memory_space<vmem>>, %arg9: memref<2x8x128xf32, #tpu.memory_space<vmem>>, %arg10: memref<2x8x128xf32, #tpu.memory_space<vmem>>, %arg11: memref<2x8x32xf32, #tpu.memory_space<vmem>>) attributes {dimension_semantics = [#tpu.dimension_semantics<parallel>, #tpu.dimension_semantics<arbitrary>], iteration_bounds = array<i64: 1, 1>, scalar_prefetch = 0 : i64, scratch_operands = 3 : i64, tpu.core_type = #tpu.core_type<tc>, window_params = [{transform_indices = @transform_0, window_bounds = array<i64: 2, 8, 16>}, {transform_indices = @transform_1, window_bounds = array<i64: 2, 8, 16>}, {pipeline_mode = #tpu.pipeline_mode<synchronous>, transform_indices = @transform_2, window_bounds = array<i64: 16, 128>}, {pipeline_mode = #tpu.pipeline_mode<synchronous>, transform_indices = @transform_3, window_bounds = array<i64: 16, 128>}, {pipeline_mode = #tpu.pipeline_mode<synchronous>, transform_indices = @transform_4, window_bounds = array<i64: 16, 128>}, {pipeline_mode = #tpu.pipeline_mode<synchronous>, transform_indices = @transform_5, window_bounds = array<i64: 32, 128>}, {transform_indices = @transform_6, window_bounds = array<i64: 2, 8, 128>}]} {
    %c0_i32 = arith.constant 0 : i32
    %0 = arith.cmpi eq, %arg1, %c0_i32 : i32
    %1 = arith.extui %0 : i1 to i32
    %c0_i32_0 = arith.constant 0 : i32
    %2 = arith.cmpi ne, %1, %c0_i32_0 : i32
    scf.if %2 {
      %c0_63 = arith.constant 0 : index
      %c0_64 = arith.constant 0 : index
      %c0_65 = arith.constant 0 : index
      %78 = vector.load %arg3[%c0_63, %c0_64, %c0_65] : memref<2x8x16xf32, #tpu.memory_space<vmem>>, vector<2x8x16xf32>
      %79 = vector.shape_cast %78 : vector<2x8x16xf32> to vector<16x16xf32>
      %c0_66 = arith.constant 0 : index
      %c0_67 = arith.constant 0 : index
      %80 = vector.load %arg5[%c0_66, %c0_67] : memref<16x128xf32, #tpu.memory_space<vmem>>, vector<16x128xf32>
      %cst_68 = arith.constant dense<0.000000e+00> : vector<16x128xf32>
      %81 = tpu.matmul %79, %80, %cst_68 {dimension_numbers = #tpu.dot_dimension_numbers<[1], [0], [0], [1], [0, 0, 1, 1], [], []>} : vector<16x16xf32>, vector<16x128xf32>, vector<16x128xf32> -> vector<16x128xf32>
      %c0_69 = arith.constant 0 : index
      %c0_70 = arith.constant 0 : index
      %82 = vector.load %arg6[%c0_69, %c0_70] : memref<16x128xf32, #tpu.memory_space<vmem>>, vector<16x128xf32>
      %cst_71 = arith.constant dense<0.000000e+00> : vector<16x128xf32>
      %83 = tpu.matmul %79, %82, %cst_71 {dimension_numbers = #tpu.dot_dimension_numbers<[1], [0], [0], [1], [0, 0, 1, 1], [], []>} : vector<16x16xf32>, vector<16x128xf32>, vector<16x128xf32> -> vector<16x128xf32>
      %84 = vector.shape_cast %81 : vector<16x128xf32> to vector<2x8x128xf32>
      %c0_72 = arith.constant 0 : index
      %c0_73 = arith.constant 0 : index
      %c0_74 = arith.constant 0 : index
      %85 = vector.load %arg9[%c0_72, %c0_73, %c0_74] : memref<2x8x128xf32, #tpu.memory_space<vmem>>, vector<2x8x128xf32>
      tpu.vector_store %arg9[%c0_72, %c0_73, %c0_74], %84 {strides = array<i32>} : memref<2x8x128xf32, #tpu.memory_space<vmem>>, vector<2x8x128xf32>,
      %86 = vector.shape_cast %83 : vector<16x128xf32> to vector<2x8x128xf32>
      %c0_75 = arith.constant 0 : index
      %c0_76 = arith.constant 0 : index
      %c0_77 = arith.constant 0 : index
      %87 = vector.load %arg10[%c0_75, %c0_76, %c0_77] : memref<2x8x128xf32, #tpu.memory_space<vmem>>, vector<2x8x128xf32>
      tpu.vector_store %arg10[%c0_75, %c0_76, %c0_77], %86 {strides = array<i32>} : memref<2x8x128xf32, #tpu.memory_space<vmem>>, vector<2x8x128xf32>,
    } else {
    }
    %c0 = arith.constant 0 : index
    %c0_1 = arith.constant 0 : index
    %c0_2 = arith.constant 0 : index
    %3 = vector.load %arg2[%c0, %c0_1, %c0_2] : memref<2x8x16xf32, #tpu.memory_space<vmem>>, vector<2x8x16xf32>
    %4 = vector.shape_cast %3 : vector<2x8x16xf32> to vector<16x16xf32>
    %c0_3 = arith.constant 0 : index
    %c0_4 = arith.constant 0 : index
    %5 = vector.load %arg4[%c0_3, %c0_4] : memref<16x128xf32, #tpu.memory_space<vmem>>, vector<16x128xf32>
    %cst = arith.constant dense<0.000000e+00> : vector<16x128xf32>
    %6 = tpu.matmul %4, %5, %cst {dimension_numbers = #tpu.dot_dimension_numbers<[1], [0], [0], [1], [0, 0, 1, 1], [], []>} : vector<16x16xf32>, vector<16x128xf32>, vector<16x128xf32> -> vector<16x128xf32>
    %7 = vector.shape_cast %6 : vector<16x128xf32> to vector<2x8x128xf32>
    %8 = vector.extract_strided_slice %7 {offsets = [0, 0, 0], sizes = [2, 8, 8], strides = [1, 1, 1]} : vector<2x8x128xf32> to vector<2x8x8xf32>
    %c0_5 = arith.constant 0 : index
    %c0_6 = arith.constant 0 : index
    %c0_7 = arith.constant 0 : index
    %9 = vector.load %arg9[%c0_5, %c0_6, %c0_7] : memref<2x8x128xf32, #tpu.memory_space<vmem>>, vector<2x8x8xf32>
    %c0_8 = arith.constant 0 : index
    %c0_9 = arith.constant 0 : index
    %c0_10 = arith.constant 0 : index
    %10 = vector.load %arg10[%c0_8, %c0_9, %c0_10] : memref<2x8x128xf32, #tpu.memory_space<vmem>>, vector<2x8x8xf32>
    "tpu.trace_start"() <{level = 10 : i32, message = "bqk,bgk->bqg"}> : () -> ()
    %cst_11 = arith.constant dense<0.000000e+00> : vector<2x8x8xf32>
    %11 = tpu.matmul %8, %9, %cst_11 {dimension_numbers = #tpu.dot_dimension_numbers<[2], [2], [1], [1], [0, 0, 0, 1, 1, 1], [0], [0]>} : vector<2x8x8xf32>, vector<2x8x8xf32>, vector<2x8x8xf32> -> vector<2x8x8xf32>
    "tpu.trace_stop"() : () -> ()
    %cst_12 = arith.constant dense<0xFF800000> : vector<2x8xf32>
    %12 = vector.multi_reduction <maximumf>, %11, %cst_12 [2] : vector<2x8x8xf32> to vector<2x8xf32>
    %13 = vector.shape_cast %12 : vector<2x8xf32> to vector<2x8x1xf32>
    %14 = vector.broadcast %13 : vector<2x8x1xf32> to vector<2x8x8xf32>
    %15 = arith.subf %11, %14 : vector<2x8x8xf32>
    %16 = math.exp %15 : vector<2x8x8xf32>
    %cst_13 = arith.constant dense<0.000000e+00> : vector<2x8xf32>
    %17 = vector.multi_reduction <add>, %16, %cst_13 [2] : vector<2x8x8xf32> to vector<2x8xf32>
    %18 = vector.shape_cast %17 : vector<2x8xf32> to vector<2x8x1xf32>
    %19 = tpu.reciprocal %18 : vector<2x8x1xf32> -> vector<2x8x1xf32>
    %20 = vector.broadcast %19 : vector<2x8x1xf32> to vector<2x8x8xf32>
    %21 = arith.mulf %16, %20 : vector<2x8x8xf32>
    "tpu.trace_start"() <{level = 10 : i32, message = "bqg,bgv->bqv"}> : () -> ()
    %cst_14 = arith.constant dense<0.000000e+00> : vector<2x8x8xf32>
    %22 = tpu.matmul %21, %10, %cst_14 {dimension_numbers = #tpu.dot_dimension_numbers<[2], [1], [1], [2], [0, 0, 0, 1, 1, 2], [0], [0]>} : vector<2x8x8xf32>, vector<2x8x8xf32>, vector<2x8x8xf32> -> vector<2x8x8xf32>
    "tpu.trace_stop"() : () -> ()
    %c0_15 = arith.constant 0 : index
    %c0_16 = arith.constant 0 : index
    %c0_17 = arith.constant 0 : index
    %23 = vector.load %arg11[%c0_15, %c0_16, %c0_17] : memref<2x8x32xf32, #tpu.memory_space<vmem>>, vector<2x8x8xf32>
    tpu.vector_store %arg11[%c0_15, %c0_16, %c0_17], %22 {strides = array<i32>} : memref<2x8x32xf32, #tpu.memory_space<vmem>>, vector<2x8x8xf32>,
    %24 = vector.extract_strided_slice %7 {offsets = [0, 0, 8], sizes = [2, 8, 8], strides = [1, 1, 1]} : vector<2x8x128xf32> to vector<2x8x8xf32>
    %c0_18 = arith.constant 0 : index
    %c0_19 = arith.constant 0 : index
    %c8 = arith.constant 8 : index
    %25 = vector.load %arg9[%c0_18, %c0_19, %c8] : memref<2x8x128xf32, #tpu.memory_space<vmem>>, vector<2x8x8xf32>
    %c0_20 = arith.constant 0 : index
    %c0_21 = arith.constant 0 : index
    %c8_22 = arith.constant 8 : index
    %26 = vector.load %arg10[%c0_20, %c0_21, %c8_22] : memref<2x8x128xf32, #tpu.memory_space<vmem>>, vector<2x8x8xf32>
    "tpu.trace_start"() <{level = 10 : i32, message = "bqk,bgk->bqg"}> : () -> ()
    %cst_23 = arith.constant dense<0.000000e+00> : vector<2x8x8xf32>
    %27 = tpu.matmul %24, %25, %cst_23 {dimension_numbers = #tpu.dot_dimension_numbers<[2], [2], [1], [1], [0, 0, 0, 1, 1, 1], [0], [0]>} : vector<2x8x8xf32>, vector<2x8x8xf32>, vector<2x8x8xf32> -> vector<2x8x8xf32>
    "tpu.trace_stop"() : () -> ()
    %cst_24 = arith.constant dense<0xFF800000> : vector<2x8xf32>
    %28 = vector.multi_reduction <maximumf>, %27, %cst_24 [2] : vector<2x8x8xf32> to vector<2x8xf32>
    %29 = vector.shape_cast %28 : vector<2x8xf32> to vector<2x8x1xf32>
    %30 = vector.broadcast %29 : vector<2x8x1xf32> to vector<2x8x8xf32>
    %31 = arith.subf %27, %30 : vector<2x8x8xf32>
    %32 = math.exp %31 : vector<2x8x8xf32>
    %cst_25 = arith.constant dense<0.000000e+00> : vector<2x8xf32>
    %33 = vector.multi_reduction <add>, %32, %cst_25 [2] : vector<2x8x8xf32> to vector<2x8xf32>
    %34 = vector.shape_cast %33 : vector<2x8xf32> to vector<2x8x1xf32>
    %35 = tpu.reciprocal %34 : vector<2x8x1xf32> -> vector<2x8x1xf32>
    %36 = vector.broadcast %35 : vector<2x8x1xf32> to vector<2x8x8xf32>
    %37 = arith.mulf %32, %36 : vector<2x8x8xf32>
    "tpu.trace_start"() <{level = 10 : i32, message = "bqg,bgv->bqv"}> : () -> ()
    %cst_26 = arith.constant dense<0.000000e+00> : vector<2x8x8xf32>
    %38 = tpu.matmul %37, %26, %cst_26 {dimension_numbers = #tpu.dot_dimension_numbers<[2], [1], [1], [2], [0, 0, 0, 1, 1, 2], [0], [0]>} : vector<2x8x8xf32>, vector<2x8x8xf32>, vector<2x8x8xf32> -> vector<2x8x8xf32>
    "tpu.trace_stop"() : () -> ()
    %c0_27 = arith.constant 0 : index
    %c0_28 = arith.constant 0 : index
    %c8_29 = arith.constant 8 : index
    %39 = vector.load %arg11[%c0_27, %c0_28, %c8_29] : memref<2x8x32xf32, #tpu.memory_space<vmem>>, vector<2x8x8xf32>
    tpu.vector_store %arg11[%c0_27, %c0_28, %c8_29], %38 {strides = array<i32>} : memref<2x8x32xf32, #tpu.memory_space<vmem>>, vector<2x8x8xf32>,
    %40 = vector.extract_strided_slice %7 {offsets = [0, 0, 16], sizes = [2, 8, 8], strides = [1, 1, 1]} : vector<2x8x128xf32> to vector<2x8x8xf32>
    %c0_30 = arith.constant 0 : index
    %c0_31 = arith.constant 0 : index
    %c16 = arith.constant 16 : index
    %41 = vector.load %arg9[%c0_30, %c0_31, %c16] : memref<2x8x128xf32, #tpu.memory_space<vmem>>, vector<2x8x8xf32>
    %c0_32 = arith.constant 0 : index
    %c0_33 = arith.constant 0 : index
    %c16_34 = arith.constant 16 : index
    %42 = vector.load %arg10[%c0_32, %c0_33, %c16_34] : memref<2x8x128xf32, #tpu.memory_space<vmem>>, vector<2x8x8xf32>
    "tpu.trace_start"() <{level = 10 : i32, message = "bqk,bgk->bqg"}> : () -> ()
    %cst_35 = arith.constant dense<0.000000e+00> : vector<2x8x8xf32>
    %43 = tpu.matmul %40, %41, %cst_35 {dimension_numbers = #tpu.dot_dimension_numbers<[2], [2], [1], [1], [0, 0, 0, 1, 1, 1], [0], [0]>} : vector<2x8x8xf32>, vector<2x8x8xf32>, vector<2x8x8xf32> -> vector<2x8x8xf32>
    "tpu.trace_stop"() : () -> ()
    %cst_36 = arith.constant dense<0xFF800000> : vector<2x8xf32>
    %44 = vector.multi_reduction <maximumf>, %43, %cst_36 [2] : vector<2x8x8xf32> to vector<2x8xf32>
    %45 = vector.shape_cast %44 : vector<2x8xf32> to vector<2x8x1xf32>
    %46 = vector.broadcast %45 : vector<2x8x1xf32> to vector<2x8x8xf32>
    %47 = arith.subf %43, %46 : vector<2x8x8xf32>
    %48 = math.exp %47 : vector<2x8x8xf32>
    %cst_37 = arith.constant dense<0.000000e+00> : vector<2x8xf32>
    %49 = vector.multi_reduction <add>, %48, %cst_37 [2] : vector<2x8x8xf32> to vector<2x8xf32>
    %50 = vector.shape_cast %49 : vector<2x8xf32> to vector<2x8x1xf32>
    %51 = tpu.reciprocal %50 : vector<2x8x1xf32> -> vector<2x8x1xf32>
    %52 = vector.broadcast %51 : vector<2x8x1xf32> to vector<2x8x8xf32>
    %53 = arith.mulf %48, %52 : vector<2x8x8xf32>
    "tpu.trace_start"() <{level = 10 : i32, message = "bqg,bgv->bqv"}> : () -> ()
    %cst_38 = arith.constant dense<0.000000e+00> : vector<2x8x8xf32>
    %54 = tpu.matmul %53, %42, %cst_38 {dimension_numbers = #tpu.dot_dimension_numbers<[2], [1], [1], [2], [0, 0, 0, 1, 1, 2], [0], [0]>} : vector<2x8x8xf32>, vector<2x8x8xf32>, vector<2x8x8xf32> -> vector<2x8x8xf32>
    "tpu.trace_stop"() : () -> ()
    %c0_39 = arith.constant 0 : index
    %c0_40 = arith.constant 0 : index
    %c16_41 = arith.constant 16 : index
    %55 = vector.load %arg11[%c0_39, %c0_40, %c16_41] : memref<2x8x32xf32, #tpu.memory_space<vmem>>, vector<2x8x8xf32>
    tpu.vector_store %arg11[%c0_39, %c0_40, %c16_41], %54 {strides = array<i32>} : memref<2x8x32xf32, #tpu.memory_space<vmem>>, vector<2x8x8xf32>,
    %56 = vector.extract_strided_slice %7 {offsets = [0, 0, 24], sizes = [2, 8, 8], strides = [1, 1, 1]} : vector<2x8x128xf32> to vector<2x8x8xf32>
    %c0_42 = arith.constant 0 : index
    %c0_43 = arith.constant 0 : index
    %c24 = arith.constant 24 : index
    %57 = vector.load %arg9[%c0_42, %c0_43, %c24] : memref<2x8x128xf32, #tpu.memory_space<vmem>>, vector<2x8x8xf32>
    %c0_44 = arith.constant 0 : index
    %c0_45 = arith.constant 0 : index
    %c24_46 = arith.constant 24 : index
    %58 = vector.load %arg10[%c0_44, %c0_45, %c24_46] : memref<2x8x128xf32, #tpu.memory_space<vmem>>, vector<2x8x8xf32>
    "tpu.trace_start"() <{level = 10 : i32, message = "bqk,bgk->bqg"}> : () -> ()
    %cst_47 = arith.constant dense<0.000000e+00> : vector<2x8x8xf32>
    %59 = tpu.matmul %56, %57, %cst_47 {dimension_numbers = #tpu.dot_dimension_numbers<[2], [2], [1], [1], [0, 0, 0, 1, 1, 1], [0], [0]>} : vector<2x8x8xf32>, vector<2x8x8xf32>, vector<2x8x8xf32> -> vector<2x8x8xf32>
    "tpu.trace_stop"() : () -> ()
    %cst_48 = arith.constant dense<0xFF800000> : vector<2x8xf32>
    %60 = vector.multi_reduction <maximumf>, %59, %cst_48 [2] : vector<2x8x8xf32> to vector<2x8xf32>
    %61 = vector.shape_cast %60 : vector<2x8xf32> to vector<2x8x1xf32>
    %62 = vector.broadcast %61 : vector<2x8x1xf32> to vector<2x8x8xf32>
    %63 = arith.subf %59, %62 : vector<2x8x8xf32>
    %64 = math.exp %63 : vector<2x8x8xf32>
    %cst_49 = arith.constant dense<0.000000e+00> : vector<2x8xf32>
    %65 = vector.multi_reduction <add>, %64, %cst_49 [2] : vector<2x8x8xf32> to vector<2x8xf32>
    %66 = vector.shape_cast %65 : vector<2x8xf32> to vector<2x8x1xf32>
    %67 = tpu.reciprocal %66 : vector<2x8x1xf32> -> vector<2x8x1xf32>
    %68 = vector.broadcast %67 : vector<2x8x1xf32> to vector<2x8x8xf32>
    %69 = arith.mulf %64, %68 : vector<2x8x8xf32>
    "tpu.trace_start"() <{level = 10 : i32, message = "bqg,bgv->bqv"}> : () -> ()
    %cst_50 = arith.constant dense<0.000000e+00> : vector<2x8x8xf32>
    %70 = tpu.matmul %69, %58, %cst_50 {dimension_numbers = #tpu.dot_dimension_numbers<[2], [1], [1], [2], [0, 0, 0, 1, 1, 2], [0], [0]>} : vector<2x8x8xf32>, vector<2x8x8xf32>, vector<2x8x8xf32> -> vector<2x8x8xf32>
    "tpu.trace_stop"() : () -> ()
    %c0_51 = arith.constant 0 : index
    %c0_52 = arith.constant 0 : index
    %c24_53 = arith.constant 24 : index
    %71 = vector.load %arg11[%c0_51, %c0_52, %c24_53] : memref<2x8x32xf32, #tpu.memory_space<vmem>>, vector<2x8x8xf32>
    tpu.vector_store %arg11[%c0_51, %c0_52, %c24_53], %70 {strides = array<i32>} : memref<2x8x32xf32, #tpu.memory_space<vmem>>, vector<2x8x8xf32>,
    %c0_54 = arith.constant 0 : index
    %c0_55 = arith.constant 0 : index
    %c0_56 = arith.constant 0 : index
    %72 = vector.load %arg11[%c0_54, %c0_55, %c0_56] : memref<2x8x32xf32, #tpu.memory_space<vmem>>, vector<2x8x32xf32>
    %73 = vector.shape_cast %72 : vector<2x8x32xf32> to vector<16x32xf32>
    %c0_57 = arith.constant 0 : index
    %c0_58 = arith.constant 0 : index
    %74 = vector.load %arg7[%c0_57, %c0_58] : memref<32x128xf32, #tpu.memory_space<vmem>>, vector<32x128xf32>
    %cst_59 = arith.constant dense<0.000000e+00> : vector<16x128xf32>
    %75 = tpu.matmul %73, %74, %cst_59 {dimension_numbers = #tpu.dot_dimension_numbers<[1], [0], [0], [1], [0, 0, 1, 1], [], []>} : vector<16x32xf32>, vector<32x128xf32>, vector<16x128xf32> -> vector<16x128xf32>
    %76 = vector.shape_cast %75 : vector<16x128xf32> to vector<2x8x128xf32>
    %c0_60 = arith.constant 0 : index
    %c0_61 = arith.constant 0 : index
    %c0_62 = arith.constant 0 : index
    %77 = vector.load %arg8[%c0_60, %c0_61, %c0_62] : memref<2x8x128xf32, #tpu.memory_space<vmem>>, vector<2x8x128xf32>
    tpu.vector_store %arg8[%c0_60, %c0_61, %c0_62], %76 {strides = array<i32>} : memref<2x8x128xf32, #tpu.memory_space<vmem>>, vector<2x8x128xf32>,
    return
  }
  func.func @transform_0(%arg0: i32, %arg1: i32) -> (i32, i32, i32) {
    %c0_i32 = arith.constant 0 : i32
    %c0_i32_0 = arith.constant 0 : i32
    return %arg0, %arg1, %c0_i32 : i32, i32, i32
  }
  func.func @transform_1(%arg0: i32, %arg1: i32) -> (i32, i32, i32) {
    %c0_i32 = arith.constant 0 : i32
    %c0_i32_0 = arith.constant 0 : i32
    %c0_i32_1 = arith.constant 0 : i32
    return %arg0, %c0_i32, %c0_i32_0 : i32, i32, i32
  }
  func.func @transform_2(%arg0: i32, %arg1: i32) -> (i32, i32) {
    %c0_i32 = arith.constant 0 : i32
    %c0_i32_0 = arith.constant 0 : i32
    %c0_i32_1 = arith.constant 0 : i32
    return %c0_i32, %c0_i32_0 : i32, i32
  }
  func.func @transform_3(%arg0: i32, %arg1: i32) -> (i32, i32) {
    %c0_i32 = arith.constant 0 : i32
    %c0_i32_0 = arith.constant 0 : i32
    %c0_i32_1 = arith.constant 0 : i32
    return %c0_i32, %c0_i32_0 : i32, i32
  }
  func.func @transform_4(%arg0: i32, %arg1: i32) -> (i32, i32) {
    %c0_i32 = arith.constant 0 : i32
    %c0_i32_0 = arith.constant 0 : i32
    %c0_i32_1 = arith.constant 0 : i32
    return %c0_i32, %c0_i32_0 : i32, i32
  }
  func.func @transform_5(%arg0: i32, %arg1: i32) -> (i32, i32) {
    %c0_i32 = arith.constant 0 : i32
    %c0_i32_0 = arith.constant 0 : i32
    %c0_i32_1 = arith.constant 0 : i32
    return %c0_i32, %c0_i32_0 : i32, i32
  }
  func.func @transform_6(%arg0: i32, %arg1: i32) -> (i32, i32, i32) {
    %c0_i32 = arith.constant 0 : i32
    %c0_i32_0 = arith.constant 0 : i32
    return %arg0, %arg1, %c0_i32 : i32, i32, i32
  }
}

</mosaic_0001>

<llo_original>
// kernel: tpu_custom_call.1
$region0: #{tpu_custom_call.1}
  #allocation0 [shape = 'u32[]', space=smem, size = 0x4, offset = 0x4, fixed_abs, tag = 'smem constant byte address 0x4 - core index']
  #allocation1 [shape = 'u32[144,128]{1,0:T(1,128)}', space=vmem, size = 0x12000, scoped, tag = 'internal scratch']
  #allocation2 [shape = 'f32[2,8,128]{2,1,0:T(8,128)}', space=vmem, size = 0x2000, scoped, tag = 'scratch operand']
  #allocation3 [shape = 'f32[2,8,128]{2,1,0:T(8,128)}', space=vmem, size = 0x2000, scoped, tag = 'scratch operand']
  #allocation4 [shape = 'f32[2,8,32]{2,1,0:T(8,128)}', space=vmem, size = 0x2000, scoped, tag = 'scratch operand']
  %s0 = inlined_call_operand.hbm [shape: f32[2,8,16], index: 0, kind: input, shape index: {}]
  %s1 = inlined_call_operand.hbm [shape: f32[2,8,16], index: 1, kind: input, shape index: {}]
  %s2 = inlined_call_operand.hbm [shape: f32[16,128], index: 2, kind: input, shape index: {}]
  %s3 = inlined_call_operand.hbm [shape: f32[16,128], index: 3, kind: input, shape index: {}]
  %s4 = inlined_call_operand.hbm [shape: f32[16,128], index: 4, kind: input, shape index: {}]
  %s5 = inlined_call_operand.hbm [shape: f32[32,128], index: 5, kind: input, shape index: {}]
  %s6 = inlined_call_operand.hbm [shape: f32[2,8,128], index: 6, kind: output, shape index: {}]
  %s7 = sld [smem:[#allocation0]]
  $region62: #{tpu_custom_call.1} parent=0
    _
  %s9 = ssub.s32 1, %s7
  %s10 = scalar_select 0, %s9, %s7
  $region1: #{tpu_custom_call.1} parent=0
    #allocation5 [shape = 'u8[8192]{0}', space=vmem, size = 0x2000, scoped, tag = 'input window, operand 0, single buffered']
    #allocation6 [shape = 's32[1]{0}', space=sflag, size = 0x4, scoped, tag = 'scoped memory for tpu_custom_call.1']
    #allocation7 [shape = 's32[1]{0}', space=sflag, size = 0x4, scoped, tag = 'scoped memory for tpu_custom_call.1']
    #allocation8 [shape = 'u8[8192]{0}', space=vmem, size = 0x2000, scoped, tag = 'input window, operand 1, single buffered']
    #allocation9 [shape = 's32[1]{0}', space=sflag, size = 0x4, scoped, tag = 'scoped memory for tpu_custom_call.1']
    #allocation10 [shape = 'u8[8192]{0}', space=vmem, size = 0x2000, scoped, tag = 'input window, operand 2, single buffered']
    #allocation11 [shape = 'u8[8192]{0}', space=vmem, size = 0x2000, scoped, tag = 'input window, operand 3, single buffered']
    #allocation12 [shape = 's32[1]{0}', space=sflag, size = 0x4, scoped, tag = 'scoped memory for tpu_custom_call.1']
    #allocation13 [shape = 'u8[8192]{0}', space=vmem, size = 0x2000, scoped, tag = 'input window, operand 4, single buffered']
    #allocation14 [shape = 'u8[16384]{0}', space=vmem, size = 0x4000, scoped, tag = 'input window, operand 5, single buffered']
    #allocation15 [shape = 's32[1]{0}', space=sflag, size = 0x4, scoped, tag = 'scoped memory for tpu_custom_call.1']
    #allocation16 [shape = 'u8[8192]{0}', space=vmem, size = 0x2000, scoped, tag = 'output window, operand 0, single buffered']
    %11 = vsyncpa [#allocation6], 0
    %12 = vsyncpa [#allocation9], 0
    %13 = vsyncpa [#allocation12], 0
    %14 = vsyncpa [#allocation15], 0
    %15 = vsyncpa [#allocation7], 0
    // Predicated region
    $region2: #{tpu_custom_call.1} parent=1 // pred_check
      _
    $region3: #{tpu_custom_call.1} parent=1 // pred_check_branch
      %17 = sbr.rel (0) target = $region5
    $region4: #{tpu_custom_call.1} parent=1 // pred_region
      %s19 = ssub.s32 256, 256
      %20 = vsyncadd [#allocation6], %s19
      %s21 = sshll.u32 [#allocation5], 4
      %s22 = int_to_ptr.vmem [resolvable:$true] %s21
      %27 = dma.hbm_to_vmem [thread:$0]  %s0, 256, %s22, [#allocation6], 128, 128, 8
    $region5: #{tpu_custom_call.1} parent=1 // pred_fallthru
      _
    // Predicated region
    $region6: #{tpu_custom_call.1} parent=1 // pred_check
      _
    $region7: #{tpu_custom_call.1} parent=1 // pred_check_branch
      %29 = sbr.rel (0) target = $region9
    $region8: #{tpu_custom_call.1} parent=1 // pred_region
      %s31 = ssub.s32 256, 256
      %32 = vsyncadd [#allocation9], %s31
      %s33 = sshll.u32 [#allocation8], 4
      %s34 = int_to_ptr.vmem [resolvable:$true] %s33
      %39 = dma.hbm_to_vmem [thread:$0]  %s1, 256, %s34, [#allocation9], 128, 128, 8
    $region9: #{tpu_custom_call.1} parent=1 // pred_fallthru
      _
    // Predicated region
    $region10: #{tpu_custom_call.1} parent=1 // pred_check
      _
    $region11: #{tpu_custom_call.1} parent=1 // pred_check_branch
      %41 = sbr.rel (0) target = $region13
    $region12: #{tpu_custom_call.1} parent=1 // pred_region
      %s43 = ssub.s32 256, 256
      %44 = vsyncadd [#allocation9], %s43
      %s45 = sshll.u32 [#allocation10], 4
      %s46 = int_to_ptr.vmem [resolvable:$true] %s45
      %51 = dma.hbm_to_vmem [thread:$0]  %s2, 256, %s46, [#allocation9], 128, 128, 8
    $region13: #{tpu_custom_call.1} parent=1 // pred_fallthru
      _
    // Predicated region
    $region14: #{tpu_custom_call.1} parent=1 // pred_check
      _
    $region15: #{tpu_custom_call.1} parent=1 // pred_check_branch
      %53 = sbr.rel (0) target = $region17
    $region16: #{tpu_custom_call.1} parent=1 // pred_region
      %s55 = ssub.s32 256, 256
      %56 = vsyncadd [#allocation12], %s55
      %s57 = sshll.u32 [#allocation11], 4
      %s58 = int_to_ptr.vmem [resolvable:$true] %s57
      %63 = dma.hbm_to_vmem [thread:$0]  %s3, 256, %s58, [#allocation12], 128, 128, 8
    $region17: #{tpu_custom_call.1} parent=1 // pred_fallthru
      _
    // Predicated region
    $region18: #{tpu_custom_call.1} parent=1 // pred_check
      _
    $region19: #{tpu_custom_call.1} parent=1 // pred_check_branch
      %65 = sbr.rel (0) target = $region21
    $region20: #{tpu_custom_call.1} parent=1 // pred_region
      %s67 = ssub.s32 256, 256
      %68 = vsyncadd [#allocation12], %s67
      %s69 = sshll.u32 [#allocation13], 4
      %s70 = int_to_ptr.vmem [resolvable:$true] %s69
      %75 = dma.hbm_to_vmem [thread:$0]  %s4, 256, %s70, [#allocation12], 128, 128, 8
    $region21: #{tpu_custom_call.1} parent=1 // pred_fallthru
      _
    // Predicated region
    $region22: #{tpu_custom_call.1} parent=1 // pred_check
      _
    $region23: #{tpu_custom_call.1} parent=1 // pred_check_branch
      %77 = sbr.rel (0) target = $region25
    $region24: #{tpu_custom_call.1} parent=1 // pred_region
      %s79 = ssub.s32 512, 512
      %80 = vsyncadd [#allocation15], %s79
      %s81 = sshll.u32 [#allocation14], 4
      %s82 = int_to_ptr.vmem [resolvable:$true] %s81
      %87 = dma.hbm_to_vmem [thread:$0]  %s5, 512, %s82, [#allocation15], 128, 128, 8
    $region25: #{tpu_custom_call.1} parent=1 // pred_fallthru
      _
    // Predicated region
    $region26: #{tpu_custom_call.1} parent=1 // pred_check
      _
    $region27: #{tpu_custom_call.1} parent=1 // pred_check_branch
      %89 = sbr.rel (0) target = $region29
    $region28: #{tpu_custom_call.1} parent=1 // pred_region
      %90 = dma.done [#allocation6], 256
    $region29: #{tpu_custom_call.1} parent=1 // pred_fallthru
      _
    // Predicated region
    $region30: #{tpu_custom_call.1} parent=1 // pred_check
      _
    $region31: #{tpu_custom_call.1} parent=1 // pred_check_branch
      %92 = sbr.rel (0) target = $region33
    $region32: #{tpu_custom_call.1} parent=1 // pred_region
      %93 = dma.done [#allocation9], 256
    $region33: #{tpu_custom_call.1} parent=1 // pred_fallthru
      _
    // Predicated region
    $region34: #{tpu_custom_call.1} parent=1 // pred_check
      _
    $region35: #{tpu_custom_call.1} parent=1 // pred_check_branch
      %95 = sbr.rel (0) target = $region37
    $region36: #{tpu_custom_call.1} parent=1 // pred_region
      %96 = dma.done [#allocation9], 256
    $region37: #{tpu_custom_call.1} parent=1 // pred_fallthru
      _
    // Predicated region
    $region38: #{tpu_custom_call.1} parent=1 // pred_check
      _
    $region39: #{tpu_custom_call.1} parent=1 // pred_check_branch
      %98 = sbr.rel (0) target = $region41
    $region40: #{tpu_custom_call.1} parent=1 // pred_region
      %99 = dma.done [#allocation12], 256
    $region41: #{tpu_custom_call.1} parent=1 // pred_fallthru
      _
    // Predicated region
    $region42: #{tpu_custom_call.1} parent=1 // pred_check
      _
    $region43: #{tpu_custom_call.1} parent=1 // pred_check_branch
      %101 = sbr.rel (0) target = $region45
    $region44: #{tpu_custom_call.1} parent=1 // pred_region
      %102 = dma.done [#allocation12], 256
    $region45: #{tpu_custom_call.1} parent=1 // pred_fallthru
      _
    // Predicated region
    $region46: #{tpu_custom_call.1} parent=1 // pred_check
      _
    $region47: #{tpu_custom_call.1} parent=1 // pred_check_branch
      %104 = sbr.rel (0) target = $region49
    $region48: #{tpu_custom_call.1} parent=1 // pred_region
      %105 = dma.done [#allocation15], 512
    $region49: #{tpu_custom_call.1} parent=1 // pred_fallthru
      _
    %p106 = scmp.eq.s32.totalorder 0, 0
    // Predicated region
    $region50: #{tpu_custom_call.1} parent=1 // pred_check
      %p107 = pneg %p106
    $region51: #{tpu_custom_call.1} parent=1 // pred_check_branch
      %109 = sbr.rel (%p107) target = $region53
    $region52: #{tpu_custom_call.1} parent=1 // pred_region
      %v110 = vld [vmem:[#allocation8] sm:$0xff]
      %v111 = vld [vmem:[#allocation8 + $0x8] sm:$0xff]
      %v112 = vld [vmem:[#allocation11] sm:$0xff]
      %v113 = vld [vmem:[#allocation11 + $0x8] sm:$0xff]
      %vm114 = vcmask 130048
      %v116 = vsel %vm114, %v110, 0
      %v119 = vsel %vm114, %v111, 0
      %121 = vmatprep.subr.mxu0 0.0
      %122 = vmatpush1.msra.mxu0 %v112
      %123 = vmatprep.subr.mxu0 0.0
      %124 = vmatpush1.msra.mxu0 %v113
      %125 = vmatprep.subr.mxu0 0.0
      %126 = vmatpush1.msra.mxu0 0.0
      %127 = vmatprep.subr.mxu0 0.0
      %128 = vmatpush1.msra.mxu0 0.0
      %129 = vmatprep.subr.mxu0 0.0
      %130 = vmatpush1.msra.mxu0 0.0
      %131 = vmatprep.subr.mxu0 0.0
      %132 = vmatpush1.msra.mxu0 0.0
      %133 = vmatprep.subr.mxu0 0.0
      %134 = vmatpush1.msra.mxu0 0.0
      %135 = vmatprep.subr.mxu0 0.0
      %136 = vmatpush1.msra.mxu0 0.0
      %137 = vmatprep.subr.mxu0 0.0
      %138 = vmatpush1.msra.mxu0 0.0
      %139 = vmatprep.subr.mxu0 0.0
      %140 = vmatpush1.msra.mxu0 0.0
      %141 = vmatprep.subr.mxu0 0.0
      %142 = vmatpush1.msra.mxu0 0.0
      %143 = vmatprep.subr.mxu0 0.0
      %144 = vmatpush1.msra.mxu0 0.0
      %145 = vmatprep.subr.mxu0 0.0
      %146 = vmatpush1.msra.mxu0 0.0
      %147 = vmatprep.subr.mxu0 0.0
      %148 = vmatpush1.msra.mxu0 0.0
      %149 = vmatprep.subr.mxu0 0.0
      %150 = vmatpush1.msra.mxu0 0.0
      %151 = vmatprep.subr.mxu0 0.0
      %152 = vmatpush1.msra.mxu0 0.0
      %153 = vmatprep.subr.mxu0 0.0
      %154 = vmatpush1.msra.mxu0 0.0
      %155 = vmatprep.subr.mxu0 0.0
      %156 = vmatpush1.msra.mxu0 0.0
      %157 = vmatprep.subr.mxu0 0.0
      %158 = vmatpush1.msra.mxu0 0.0
      %159 = vmatprep.subr.mxu0 0.0
      %160 = vmatpush1.msra.mxu0 0.0
      %161 = vmatprep.subr.mxu0 0.0
      %162 = vmatpush1.msra.mxu0 0.0
      %163 = vmatprep.subr.mxu0 0.0
      %164 = vmatpush1.msra.mxu0 0.0
      %165 = vmatprep.subr.mxu0 0.0
      %166 = vmatpush1.msra.mxu0 0.0
      %167 = vmatprep.subr.mxu0 0.0
      %168 = vmatpush1.msra.mxu0 0.0
      %169 = vmatprep.subr.mxu0 0.0
      %170 = vmatpush1.msra.mxu0 0.0
      %171 = vmatprep.subr.mxu0 0.0
      %172 = vmatpush1.msra.mxu0 0.0
      %173 = vmatprep.subr.mxu0 0.0
      %174 = vmatpush1.msra.mxu0 0.0
      %175 = vmatprep.subr.mxu0 0.0
      %176 = vmatpush1.msra.mxu0 0.0
      %177 = vmatprep.subr.mxu0 0.0
      %178 = vmatpush1.msra.mxu0 0.0
      %179 = vmatprep.subr.mxu0 0.0
      %180 = vmatpush1.msra.mxu0 0.0
      %181 = vmatprep.subr.mxu0 0.0
      %182 = vmatpush1.msra.mxu0 0.0
      %183 = vmatprep.subr.mxu0 0.0
      %184 = vmatpush1.msra.mxu0 0.0
      %185 = vmatprep.mubr.f32.mxu0 0.0
      %186 = vmatmul.mubr.f32.gmra.mrb[0].mxu0 %v116
      %v187 = vpop.f32.mrb[0].mxu0
      %v188 = vadd.f32 0.0, %v187
      %v189 = vpop.f32.mrb[0].mxu0
      %190 = vmatprep.mubr.f32.mxu0 0.0
      %191 = vmatmul.mubr.f32.gmra.mrb[0].mxu0 %v119
      %v192 = vpop.f32.mrb[0].mxu0
      %v193 = vadd.f32 0.0, %v192
      %v194 = vpop.f32.mrb[0].mxu0
      %195 = vdwg.mxu0
      %v196 = vld [vmem:[#allocation13] sm:$0xff]
      %v197 = vld [vmem:[#allocation13 + $0x8] sm:$0xff]
      %198 = vmatprep.subr.mxu0 0.0
      %199 = vmatpush1.msra.mxu0 %v196
      %200 = vmatprep.subr.mxu0 0.0
      %201 = vmatpush1.msra.mxu0 %v197
      %202 = vmatprep.subr.mxu0 0.0
      %203 = vmatpush1.msra.mxu0 0.0
      %204 = vmatprep.subr.mxu0 0.0
      %205 = vmatpush1.msra.mxu0 0.0
      %206 = vmatprep.subr.mxu0 0.0
      %207 = vmatpush1.msra.mxu0 0.0
      %208 = vmatprep.subr.mxu0 0.0
      %209 = vmatpush1.msra.mxu0 0.0
      %210 = vmatprep.subr.mxu0 0.0
      %211 = vmatpush1.msra.mxu0 0.0
      %212 = vmatprep.subr.mxu0 0.0
      %213 = vmatpush1.msra.mxu0 0.0
      %214 = vmatprep.subr.mxu0 0.0
      %215 = vmatpush1.msra.mxu0 0.0
      %216 = vmatprep.subr.mxu0 0.0
      %217 = vmatpush1.msra.mxu0 0.0
      %218 = vmatprep.subr.mxu0 0.0
      %219 = vmatpush1.msra.mxu0 0.0
      %220 = vmatprep.subr.mxu0 0.0
      %221 = vmatpush1.msra.mxu0 0.0
      %222 = vmatprep.subr.mxu0 0.0
      %223 = vmatpush1.msra.mxu0 0.0
      %224 = vmatprep.subr.mxu0 0.0
      %225 = vmatpush1.msra.mxu0 0.0
      %226 = vmatprep.subr.mxu0 0.0
      %227 = vmatpush1.msra.mxu0 0.0
      %228 = vmatprep.subr.mxu0 0.0
      %229 = vmatpush1.msra.mxu0 0.0
      %230 = vmatprep.subr.mxu0 0.0
      %231 = vmatpush1.msra.mxu0 0.0
      %232 = vmatprep.subr.mxu0 0.0
      %233 = vmatpush1.msra.mxu0 0.0
      %234 = vmatprep.subr.mxu0 0.0
      %235 = vmatpush1.msra.mxu0 0.0
      %236 = vmatprep.subr.mxu0 0.0
      %237 = vmatpush1.msra.mxu0 0.0
      %238 = vmatprep.subr.mxu0 0.0
      %239 = vmatpush1.msra.mxu0 0.0
      %240 = vmatprep.subr.mxu0 0.0
      %241 = vmatpush1.msra.mxu0 0.0
      %242 = vmatprep.subr.mxu0 0.0
      %243 = vmatpush1.msra.mxu0 0.0
      %244 = vmatprep.subr.mxu0 0.0
      %245 = vmatpush1.msra.mxu0 0.0
      %246 = vmatprep.subr.mxu0 0.0
      %247 = vmatpush1.msra.mxu0 0.0
      %248 = vmatprep.subr.mxu0 0.0
      %249 = vmatpush1.msra.mxu0 0.0
      %250 = vmatprep.subr.mxu0 0.0
      %251 = vmatpush1.msra.mxu0 0.0
      %252 = vmatprep.subr.mxu0 0.0
      %253 = vmatpush1.msra.mxu0 0.0
      %254 = vmatprep.subr.mxu0 0.0
      %255 = vmatpush1.msra.mxu0 0.0
      %256 = vmatprep.subr.mxu0 0.0
      %257 = vmatpush1.msra.mxu0 0.0
      %258 = vmatprep.subr.mxu0 0.0
      %259 = vmatpush1.msra.mxu0 0.0
      %260 = vmatprep.subr.mxu0 0.0
      %261 = vmatpush1.msra.mxu0 0.0
      %262 = vmatprep.mubr.f32.mxu0 0.0
      %263 = vmatmul.mubr.f32.gmra.mrb[0].mxu0 %v116
      %v264 = vpop.f32.mrb[0].mxu0
      %v265 = vadd.f32 0.0, %v264
      %v266 = vpop.f32.mrb[0].mxu0
      %267 = vmatprep.mubr.f32.mxu0 0.0
      %268 = vmatmul.mubr.f32.gmra.mrb[0].mxu0 %v119
      %v269 = vpop.f32.mrb[0].mxu0
      %v270 = vadd.f32 0.0, %v269
      %v271 = vpop.f32.mrb[0].mxu0
      %272 = vdwg.mxu0
      %273 = vst [vmem:[#allocation2] sm:$0xff] %v188
      %274 = vst [vmem:[#allocation2 + $0x8] sm:$0xff] %v193
      %275 = vst [vmem:[#allocation3] sm:$0xff] %v265
      %276 = vst [vmem:[#allocation3 + $0x8] sm:$0xff] %v270
    $region53: #{tpu_custom_call.1} parent=1 // pred_fallthru
      _
    %v277 = vld [vmem:[#allocation5] sm:$0xff]
    %v278 = vld [vmem:[#allocation5 + $0x8] sm:$0xff]
    %v279 = vld [vmem:[#allocation10] sm:$0xff]
    %v280 = vld [vmem:[#allocation10 + $0x8] sm:$0xff]
    %vm281 = vcmask 130048
    %v283 = vsel %vm281, %v277, 0
    %v286 = vsel %vm281, %v278, 0
    %288 = vmatprep.subr.mxu0 0.0
    %289 = vmatpush1.msra.mxu0 %v279
    %290 = vmatprep.subr.mxu0 0.0
    %291 = vmatpush1.msra.mxu0 %v280
    %292 = vmatprep.subr.mxu0 0.0
    %293 = vmatpush1.msra.mxu0 0.0
    %294 = vmatprep.subr.mxu0 0.0
    %295 = vmatpush1.msra.mxu0 0.0
    %296 = vmatprep.subr.mxu0 0.0
    %297 = vmatpush1.msra.mxu0 0.0
    %298 = vmatprep.subr.mxu0 0.0
    %299 = vmatpush1.msra.mxu0 0.0
    %300 = vmatprep.subr.mxu0 0.0
    %301 = vmatpush1.msra.mxu0 0.0
    %302 = vmatprep.subr.mxu0 0.0
    %303 = vmatpush1.msra.mxu0 0.0
    %304 = vmatprep.subr.mxu0 0.0
    %305 = vmatpush1.msra.mxu0 0.0
    %306 = vmatprep.subr.mxu0 0.0
    %307 = vmatpush1.msra.mxu0 0.0
    %308 = vmatprep.subr.mxu0 0.0
    %309 = vmatpush1.msra.mxu0 0.0
    %310 = vmatprep.subr.mxu0 0.0
    %311 = vmatpush1.msra.mxu0 0.0
    %312 = vmatprep.subr.mxu0 0.0
    %313 = vmatpush1.msra.mxu0 0.0
    %314 = vmatprep.subr.mxu0 0.0
    %315 = vmatpush1.msra.mxu0 0.0
    %316 = vmatprep.subr.mxu0 0.0
    %317 = vmatpush1.msra.mxu0 0.0
    %318 = vmatprep.subr.mxu0 0.0
    %319 = vmatpush1.msra.mxu0 0.0
    %320 = vmatprep.subr.mxu0 0.0
    %321 = vmatpush1.msra.mxu0 0.0
    %322 = vmatprep.subr.mxu0 0.0
    %323 = vmatpush1.msra.mxu0 0.0
    %324 = vmatprep.subr.mxu0 0.0
    %325 = vmatpush1.msra.mxu0 0.0
    %326 = vmatprep.subr.mxu0 0.0
    %327 = vmatpush1.msra.mxu0 0.0
    %328 = vmatprep.subr.mxu0 0.0
    %329 = vmatpush1.msra.mxu0 0.0
    %330 = vmatprep.subr.mxu0 0.0
    %331 = vmatpush1.msra.mxu0 0.0
    %332 = vmatprep.subr.mxu0 0.0
    %333 = vmatpush1.msra.mxu0 0.0
    %334 = vmatprep.subr.mxu0 0.0
    %335 = vmatpush1.msra.mxu0 0.0
    %336 = vmatprep.subr.mxu0 0.0
    %337 = vmatpush1.msra.mxu0 0.0
    %338 = vmatprep.subr.mxu0 0.0
    %339 = vmatpush1.msra.mxu0 0.0
    %340 = vmatprep.subr.mxu0 0.0
    %341 = vmatpush1.msra.mxu0 0.0
    %342 = vmatprep.subr.mxu0 0.0
    %343 = vmatpush1.msra.mxu0 0.0
    %344 = vmatprep.subr.mxu0 0.0
    %345 = vmatpush1.msra.mxu0 0.0
    %346 = vmatprep.subr.mxu0 0.0
    %347 = vmatpush1.msra.mxu0 0.0
    %348 = vmatprep.subr.mxu0 0.0
    %349 = vmatpush1.msra.mxu0 0.0
    %350 = vmatprep.subr.mxu0 0.0
    %351 = vmatpush1.msra.mxu0 0.0
    %352 = vmatprep.mubr.f32.mxu0 0.0
    %353 = vmatmul.mubr.f32.gmra.mrb[0].mxu0 %v283
    %v354 = vpop.f32.mrb[0].mxu0
    %v355 = vadd.f32 0.0, %v354
    %v356 = vpop.f32.mrb[0].mxu0
    %357 = vmatprep.mubr.f32.mxu0 0.0
    %358 = vmatmul.mubr.f32.gmra.mrb[0].mxu0 %v286
    %v359 = vpop.f32.mrb[0].mxu0
    %v360 = vadd.f32 0.0, %v359
    %v361 = vpop.f32.mrb[0].mxu0
    %362 = vdwg.mxu0
    %v363 = vld [vmem:[#allocation2] sm:$0xff]
    %v364 = vld [vmem:[#allocation2 + $0x8] sm:$0xff]
    %v365 = vld [vmem:[#allocation3] sm:$0xff]
    %v366 = vld [vmem:[#allocation3 + $0x8] sm:$0xff]
    %vm367 = vcmask 64512
    %v369 = vsel %vm367, %v355, 0
    %v372 = vsel %vm367, %v363, 0
    %374 = vmatprep.subr.mxu0 0.0
    %375 = vmatpush1.xpose.msra.mxu0 %v372
    %376 = vmatprep.subr.mxu0 0.0
    %377 = vmatpush1.xpose.msra.mxu0 0.0
    %378 = vmatprep.subr.mxu0 0.0
    %379 = vmatpush1.xpose.msra.mxu0 0.0
    %380 = vmatprep.subr.mxu0 0.0
    %381 = vmatpush1.xpose.msra.mxu0 0.0
    %382 = vmatprep.subr.mxu0 0.0
    %383 = vmatpush1.xpose.msra.mxu0 0.0
    %384 = vmatprep.subr.mxu0 0.0
    %385 = vmatpush1.xpose.msra.mxu0 0.0
    %386 = vmatprep.subr.mxu0 0.0
    %387 = vmatpush1.xpose.msra.mxu0 0.0
    %388 = vmatprep.subr.mxu0 0.0
    %389 = vmatpush1.xpose.msra.mxu0 0.0
    %390 = vmatprep.subr.mxu0 0.0
    %391 = vmatpush1.xpose.msra.mxu0 0.0
    %392 = vmatprep.subr.mxu0 0.0
    %393 = vmatpush1.xpose.msra.mxu0 0.0
    %394 = vmatprep.subr.mxu0 0.0
    %395 = vmatpush1.xpose.msra.mxu0 0.0
    %396 = vmatprep.subr.mxu0 0.0
    %397 = vmatpush1.xpose.msra.mxu0 0.0
    %398 = vmatprep.subr.mxu0 0.0
    %399 = vmatpush1.xpose.msra.mxu0 0.0
    %400 = vmatprep.subr.mxu0 0.0
    %401 = vmatpush1.xpose.msra.mxu0 0.0
    %402 = vmatprep.subr.mxu0 0.0
    %403 = vmatpush1.xpose.msra.mxu0 0.0
    %404 = vmatprep.subr.mxu0 0.0
    %405 = vmatpush1.xpose.msra.mxu0 0.0
    %406 = vmatprep.subr.mxu0 0.0
    %407 = vmatpush1.xpose.msra.mxu0 0.0
    %408 = vmatprep.subr.mxu0 0.0
    %409 = vmatpush1.xpose.msra.mxu0 0.0
    %410 = vmatprep.subr.mxu0 0.0
    %411 = vmatpush1.xpose.msra.mxu0 0.0
    %412 = vmatprep.subr.mxu0 0.0
    %413 = vmatpush1.xpose.msra.mxu0 0.0
    %414 = vmatprep.subr.mxu0 0.0
    %415 = vmatpush1.xpose.msra.mxu0 0.0
    %416 = vmatprep.subr.mxu0 0.0
    %417 = vmatpush1.xpose.msra.mxu0 0.0
    %418 = vmatprep.subr.mxu0 0.0
    %419 = vmatpush1.xpose.msra.mxu0 0.0
    %420 = vmatprep.subr.mxu0 0.0
    %421 = vmatpush1.xpose.msra.mxu0 0.0
    %422 = vmatprep.subr.mxu0 0.0
    %423 = vmatpush1.xpose.msra.mxu0 0.0
    %424 = vmatprep.subr.mxu0 0.0
    %425 = vmatpush1.xpose.msra.mxu0 0.0
    %426 = vmatprep.subr.mxu0 0.0
    %427 = vmatpush1.xpose.msra.mxu0 0.0
    %428 = vmatprep.subr.mxu0 0.0
    %429 = vmatpush1.xpose.msra.mxu0 0.0
    %430 = vmatprep.subr.mxu0 0.0
    %431 = vmatpush1.xpose.msra.mxu0 0.0
    %432 = vmatprep.subr.mxu0 0.0
    %433 = vmatpush1.xpose.msra.mxu0 0.0
    %434 = vmatprep.subr.mxu0 0.0
    %435 = vmatpush1.xpose.msra.mxu0 0.0
    %436 = vmatprep.subr.mxu0 0.0
    %437 = vmatpush1.xpose.msra.mxu0 0.0
    %438 = vmatprep.mubr.f32.mxu0 0.0
    %439 = vmatmul.mubr.f32.gmra.mrb[0].mxu0 %v369
    %v440 = vpop.f32.mrb[0].mxu0
    %v441 = vadd.f32 0.0, %v440
    %v442 = vpop.f32.mrb[0].mxu0
    %443 = vdwg.mxu0
    %v445 = vsel %vm367, %v360, 0
    %v448 = vsel %vm367, %v364, 0
    %450 = vmatprep.subr.mxu0 0.0
    %451 = vmatpush1.xpose.msra.mxu0 %v448
    %452 = vmatprep.subr.mxu0 0.0
    %453 = vmatpush1.xpose.msra.mxu0 0.0
    %454 = vmatprep.subr.mxu0 0.0
    %455 = vmatpush1.xpose.msra.mxu0 0.0
    %456 = vmatprep.subr.mxu0 0.0
    %457 = vmatpush1.xpose.msra.mxu0 0.0
    %458 = vmatprep.subr.mxu0 0.0
    %459 = vmatpush1.xpose.msra.mxu0 0.0
    %460 = vmatprep.subr.mxu0 0.0
    %461 = vmatpush1.xpose.msra.mxu0 0.0
    %462 = vmatprep.subr.mxu0 0.0
    %463 = vmatpush1.xpose.msra.mxu0 0.0
    %464 = vmatprep.subr.mxu0 0.0
    %465 = vmatpush1.xpose.msra.mxu0 0.0
    %466 = vmatprep.subr.mxu0 0.0
    %467 = vmatpush1.xpose.msra.mxu0 0.0
    %468 = vmatprep.subr.mxu0 0.0
    %469 = vmatpush1.xpose.msra.mxu0 0.0
    %470 = vmatprep.subr.mxu0 0.0
    %471 = vmatpush1.xpose.msra.mxu0 0.0
    %472 = vmatprep.subr.mxu0 0.0
    %473 = vmatpush1.xpose.msra.mxu0 0.0
    %474 = vmatprep.subr.mxu0 0.0
    %475 = vmatpush1.xpose.msra.mxu0 0.0
    %476 = vmatprep.subr.mxu0 0.0
    %477 = vmatpush1.xpose.msra.mxu0 0.0
    %478 = vmatprep.subr.mxu0 0.0
    %479 = vmatpush1.xpose.msra.mxu0 0.0
    %480 = vmatprep.subr.mxu0 0.0
    %481 = vmatpush1.xpose.msra.mxu0 0.0
    %482 = vmatprep.subr.mxu0 0.0
    %483 = vmatpush1.xpose.msra.mxu0 0.0
    %484 = vmatprep.subr.mxu0 0.0
    %485 = vmatpush1.xpose.msra.mxu0 0.0
    %486 = vmatprep.subr.mxu0 0.0
    %487 = vmatpush1.xpose.msra.mxu0 0.0
    %488 = vmatprep.subr.mxu0 0.0
    %489 = vmatpush1.xpose.msra.mxu0 0.0
    %490 = vmatprep.subr.mxu0 0.0
    %491 = vmatpush1.xpose.msra.mxu0 0.0
    %492 = vmatprep.subr.mxu0 0.0
    %493 = vmatpush1.xpose.msra.mxu0 0.0
    %494 = vmatprep.subr.mxu0 0.0
    %495 = vmatpush1.xpose.msra.mxu0 0.0
    %496 = vmatprep.subr.mxu0 0.0
    %497 = vmatpush1.xpose.msra.mxu0 0.0
    %498 = vmatprep.subr.mxu0 0.0
    %499 = vmatpush1.xpose.msra.mxu0 0.0
    %500 = vmatprep.subr.mxu0 0.0
    %501 = vmatpush1.xpose.msra.mxu0 0.0
    %502 = vmatprep.subr.mxu0 0.0
    %503 = vmatpush1.xpose.msra.mxu0 0.0
    %504 = vmatprep.subr.mxu0 0.0
    %505 = vmatpush1.xpose.msra.mxu0 0.0
    %506 = vmatprep.subr.mxu0 0.0
    %507 = vmatpush1.xpose.msra.mxu0 0.0
    %508 = vmatprep.subr.mxu0 0.0
    %509 = vmatpush1.xpose.msra.mxu0 0.0
    %510 = vmatprep.subr.mxu0 0.0
    %511 = vmatpush1.xpose.msra.mxu0 0.0
    %512 = vmatprep.subr.mxu0 0.0
    %513 = vmatpush1.xpose.msra.mxu0 0.0
    %514 = vmatprep.mubr.f32.mxu0 0.0
    %515 = vmatmul.mubr.f32.gmra.mrb[0].mxu0 %v445
    %v516 = vpop.f32.mrb[0].mxu0
    %v517 = vadd.f32 0.0, %v516
    %v518 = vpop.f32.mrb[0].mxu0
    %519 = vdwg.mxu0
    %v520 = vsel %vm367, %v441, -inf
    %521 = vmax.xlane.f32.xlu0 %v520
    %v522 = vpop.xlane.xlu0 %521
    %v523 = vsel %vm367, %v517, -inf
    %524 = vmax.xlane.f32.xlu0 %v523
    %v525 = vpop.xlane.xlu0 %524
    %v526 = vsub.f32 %v441, %v522
    %v527 = vsub.f32 %v517, %v525
    %v528 = vmul.f32 %v526, 1.442695
    %v529 = vpow.pop %v528
    %v530 = vmul.f32 %v527, 1.442695
    %v531 = vpow.pop %v530
    %v532 = vsel %vm367, %v529, 0.0
    %533 = vadd.xlane.f32.xlu0 %v532
    %v534 = vpop.xlane.xlu0 %533
    %v535 = vsel %vm367, %v531, 0.0
    %536 = vadd.xlane.f32.xlu0 %v535
    %v537 = vpop.xlane.xlu0 %536
    %v538 = vrcp.pop %v534
    %v539 = vrcp.pop %v537
    %v540 = vmul.f32 %v529, %v538
    %v541 = vmul.f32 %v531, %v539
    %v543 = vsel %vm367, %v540, 0
    %545 = vmatprep.subr.mxu0 0.0
    %546 = vmatpush1.msra.mxu0 %v365
    %547 = vmatprep.subr.mxu0 0.0
    %548 = vmatpush1.msra.mxu0 0.0
    %549 = vmatprep.subr.mxu0 0.0
    %550 = vmatpush1.msra.mxu0 0.0
    %551 = vmatprep.subr.mxu0 0.0
    %552 = vmatpush1.msra.mxu0 0.0
    %553 = vmatprep.subr.mxu0 0.0
    %554 = vmatpush1.msra.mxu0 0.0
    %555 = vmatprep.subr.mxu0 0.0
    %556 = vmatpush1.msra.mxu0 0.0
    %557 = vmatprep.subr.mxu0 0.0
    %558 = vmatpush1.msra.mxu0 0.0
    %559 = vmatprep.subr.mxu0 0.0
    %560 = vmatpush1.msra.mxu0 0.0
    %561 = vmatprep.subr.mxu0 0.0
    %562 = vmatpush1.msra.mxu0 0.0
    %563 = vmatprep.subr.mxu0 0.0
    %564 = vmatpush1.msra.mxu0 0.0
    %565 = vmatprep.subr.mxu0 0.0
    %566 = vmatpush1.msra.mxu0 0.0
    %567 = vmatprep.subr.mxu0 0.0
    %568 = vmatpush1.msra.mxu0 0.0
    %569 = vmatprep.subr.mxu0 0.0
    %570 = vmatpush1.msra.mxu0 0.0
    %571 = vmatprep.subr.mxu0 0.0
    %572 = vmatpush1.msra.mxu0 0.0
    %573 = vmatprep.subr.mxu0 0.0
    %574 = vmatpush1.msra.mxu0 0.0
    %575 = vmatprep.subr.mxu0 0.0
    %576 = vmatpush1.msra.mxu0 0.0
    %577 = vmatprep.subr.mxu0 0.0
    %578 = vmatpush1.msra.mxu0 0.0
    %579 = vmatprep.subr.mxu0 0.0
    %580 = vmatpush1.msra.mxu0 0.0
    %581 = vmatprep.subr.mxu0 0.0
    %582 = vmatpush1.msra.mxu0 0.0
    %583 = vmatprep.subr.mxu0 0.0
    %584 = vmatpush1.msra.mxu0 0.0
    %585 = vmatprep.subr.mxu0 0.0
    %586 = vmatpush1.msra.mxu0 0.0
    %587 = vmatprep.subr.mxu0 0.0
    %588 = vmatpush1.msra.mxu0 0.0
    %589 = vmatprep.subr.mxu0 0.0
    %590 = vmatpush1.msra.mxu0 0.0
    %591 = vmatprep.subr.mxu0 0.0
    %592 = vmatpush1.msra.mxu0 0.0
    %593 = vmatprep.subr.mxu0 0.0
    %594 = vmatpush1.msra.mxu0 0.0
    %595 = vmatprep.subr.mxu0 0.0
    %596 = vmatpush1.msra.mxu0 0.0
    %597 = vmatprep.subr.mxu0 0.0
    %598 = vmatpush1.msra.mxu0 0.0
    %599 = vmatprep.subr.mxu0 0.0
    %600 = vmatpush1.msra.mxu0 0.0
    %601 = vmatprep.subr.mxu0 0.0
    %602 = vmatpush1.msra.mxu0 0.0
    %603 = vmatprep.subr.mxu0 0.0
    %604 = vmatpush1.msra.mxu0 0.0
    %605 = vmatprep.subr.mxu0 0.0
    %606 = vmatpush1.msra.mxu0 0.0
    %607 = vmatprep.subr.mxu0 0.0
    %608 = vmatpush1.msra.mxu0 0.0
    %609 = vmatprep.mubr.f32.mxu0 0.0
    %610 = vmatmul.mubr.f32.gmra.mrb[0].mxu0 %v543
    %v611 = vpop.f32.mrb[0].mxu0
    %v612 = vadd.f32 0.0, %v611
    %v613 = vpop.f32.mrb[0].mxu0
    %614 = vdwg.mxu0
    %v616 = vsel %vm367, %v541, 0
    %618 = vmatprep.subr.mxu0 0.0
    %619 = vmatpush1.msra.mxu0 %v366
    %620 = vmatprep.subr.mxu0 0.0
    %621 = vmatpush1.msra.mxu0 0.0
    %622 = vmatprep.subr.mxu0 0.0
    %623 = vmatpush1.msra.mxu0 0.0
    %624 = vmatprep.subr.mxu0 0.0
    %625 = vmatpush1.msra.mxu0 0.0
    %626 = vmatprep.subr.mxu0 0.0
    %627 = vmatpush1.msra.mxu0 0.0
    %628 = vmatprep.subr.mxu0 0.0
    %629 = vmatpush1.msra.mxu0 0.0
    %630 = vmatprep.subr.mxu0 0.0
    %631 = vmatpush1.msra.mxu0 0.0
    %632 = vmatprep.subr.mxu0 0.0
    %633 = vmatpush1.msra.mxu0 0.0
    %634 = vmatprep.subr.mxu0 0.0
    %635 = vmatpush1.msra.mxu0 0.0
    %636 = vmatprep.subr.mxu0 0.0
    %637 = vmatpush1.msra.mxu0 0.0
    %638 = vmatprep.subr.mxu0 0.0
    %639 = vmatpush1.msra.mxu0 0.0
    %640 = vmatprep.subr.mxu0 0.0
    %641 = vmatpush1.msra.mxu0 0.0
    %642 = vmatprep.subr.mxu0 0.0
    %643 = vmatpush1.msra.mxu0 0.0
    %644 = vmatprep.subr.mxu0 0.0
    %645 = vmatpush1.msra.mxu0 0.0
    %646 = vmatprep.subr.mxu0 0.0
    %647 = vmatpush1.msra.mxu0 0.0
    %648 = vmatprep.subr.mxu0 0.0
    %649 = vmatpush1.msra.mxu0 0.0
    %650 = vmatprep.subr.mxu0 0.0
    %651 = vmatpush1.msra.mxu0 0.0
    %652 = vmatprep.subr.mxu0 0.0
    %653 = vmatpush1.msra.mxu0 0.0
    %654 = vmatprep.subr.mxu0 0.0
    %655 = vmatpush1.msra.mxu0 0.0
    %656 = vmatprep.subr.mxu0 0.0
    %657 = vmatpush1.msra.mxu0 0.0
    %658 = vmatprep.subr.mxu0 0.0
    %659 = vmatpush1.msra.mxu0 0.0
    %660 = vmatprep.subr.mxu0 0.0
    %661 = vmatpush1.msra.mxu0 0.0
    %662 = vmatprep.subr.mxu0 0.0
    %663 = vmatpush1.msra.mxu0 0.0
    %664 = vmatprep.subr.mxu0 0.0
    %665 = vmatpush1.msra.mxu0 0.0
    %666 = vmatprep.subr.mxu0 0.0
    %667 = vmatpush1.msra.mxu0 0.0
    %668 = vmatprep.subr.mxu0 0.0
    %669 = vmatpush1.msra.mxu0 0.0
    %670 = vmatprep.subr.mxu0 0.0
    %671 = vmatpush1.msra.mxu0 0.0
    %672 = vmatprep.subr.mxu0 0.0
    %673 = vmatpush1.msra.mxu0 0.0
    %674 = vmatprep.subr.mxu0 0.0
    %675 = vmatpush1.msra.mxu0 0.0
    %676 = vmatprep.subr.mxu0 0.0
    %677 = vmatpush1.msra.mxu0 0.0
    %678 = vmatprep.subr.mxu0 0.0
    %679 = vmatpush1.msra.mxu0 0.0
    %680 = vmatprep.subr.mxu0 0.0
    %681 = vmatpush1.msra.mxu0 0.0
    %682 = vmatprep.mubr.f32.mxu0 0.0
    %683 = vmatmul.mubr.f32.gmra.mrb[0].mxu0 %v616
    %v684 = vpop.f32.mrb[0].mxu0
    %v685 = vadd.f32 0.0, %v684
    %v686 = vpop.f32.mrb[0].mxu0
    %687 = vdwg.mxu0
    %688 = vst.msk [vmem:[#allocation4] sm:$0xff] %vm367, %v612
    %689 = vst.msk [vmem:[#allocation4 + $0x8] sm:$0xff] %vm367, %v685
    %v690 = vld [vmem:[#allocation2] sm:$0xff]
    %v691 = vld [vmem:[#allocation2 + $0x8] sm:$0xff]
    %v692 = vld [vmem:[#allocation3] sm:$0xff]
    %v693 = vld [vmem:[#allocation3 + $0x8] sm:$0xff]
    %694 = vrot.lane.b32.xlu0 %v355, 120
    %v695 = vpop.permute.xlu0 %694
    %697 = vrot.lane.b32.xlu0 %v690, 120
    %v698 = vpop.permute.xlu0 %697
    %v699 = vsel %vm367, %v695, 0
    %v701 = vsel %vm367, %v698, 0
    %703 = vmatprep.subr.mxu0 0.0
    %704 = vmatpush1.xpose.msra.mxu0 %v701
    %705 = vmatprep.subr.mxu0 0.0
    %706 = vmatpush1.xpose.msra.mxu0 0.0
    %707 = vmatprep.subr.mxu0 0.0
    %708 = vmatpush1.xpose.msra.mxu0 0.0
    %709 = vmatprep.subr.mxu0 0.0
    %710 = vmatpush1.xpose.msra.mxu0 0.0
    %711 = vmatprep.subr.mxu0 0.0
    %712 = vmatpush1.xpose.msra.mxu0 0.0
    %713 = vmatprep.subr.mxu0 0.0
    %714 = vmatpush1.xpose.msra.mxu0 0.0
    %715 = vmatprep.subr.mxu0 0.0
    %716 = vmatpush1.xpose.msra.mxu0 0.0
    %717 = vmatprep.subr.mxu0 0.0
    %718 = vmatpush1.xpose.msra.mxu0 0.0
    %719 = vmatprep.subr.mxu0 0.0
    %720 = vmatpush1.xpose.msra.mxu0 0.0
    %721 = vmatprep.subr.mxu0 0.0
    %722 = vmatpush1.xpose.msra.mxu0 0.0
    %723 = vmatprep.subr.mxu0 0.0
    %724 = vmatpush1.xpose.msra.mxu0 0.0
    %725 = vmatprep.subr.mxu0 0.0
    %726 = vmatpush1.xpose.msra.mxu0 0.0
    %727 = vmatprep.subr.mxu0 0.0
    %728 = vmatpush1.xpose.msra.mxu0 0.0
    %729 = vmatprep.subr.mxu0 0.0
    %730 = vmatpush1.xpose.msra.mxu0 0.0
    %731 = vmatprep.subr.mxu0 0.0
    %732 = vmatpush1.xpose.msra.mxu0 0.0
    %733 = vmatprep.subr.mxu0 0.0
    %734 = vmatpush1.xpose.msra.mxu0 0.0
    %735 = vmatprep.subr.mxu0 0.0
    %736 = vmatpush1.xpose.msra.mxu0 0.0
    %737 = vmatprep.subr.mxu0 0.0
    %738 = vmatpush1.xpose.msra.mxu0 0.0
    %739 = vmatprep.subr.mxu0 0.0
    %740 = vmatpush1.xpose.msra.mxu0 0.0
    %741 = vmatprep.subr.mxu0 0.0
    %742 = vmatpush1.xpose.msra.mxu0 0.0
    %743 = vmatprep.subr.mxu0 0.0
    %744 = vmatpush1.xpose.msra.mxu0 0.0
    %745 = vmatprep.subr.mxu0 0.0
    %746 = vmatpush1.xpose.msra.mxu0 0.0
    %747 = vmatprep.subr.mxu0 0.0
    %748 = vmatpush1.xpose.msra.mxu0 0.0
    %749 = vmatprep.subr.mxu0 0.0
    %750 = vmatpush1.xpose.msra.mxu0 0.0
    %751 = vmatprep.subr.mxu0 0.0
    %752 = vmatpush1.xpose.msra.mxu0 0.0
    %753 = vmatprep.subr.mxu0 0.0
    %754 = vmatpush1.xpose.msra.mxu0 0.0
    %755 = vmatprep.subr.mxu0 0.0
    %756 = vmatpush1.xpose.msra.mxu0 0.0
    %757 = vmatprep.subr.mxu0 0.0
    %758 = vmatpush1.xpose.msra.mxu0 0.0
    %759 = vmatprep.subr.mxu0 0.0
    %760 = vmatpush1.xpose.msra.mxu0 0.0
    %761 = vmatprep.subr.mxu0 0.0
    %762 = vmatpush1.xpose.msra.mxu0 0.0
    %763 = vmatprep.subr.mxu0 0.0
    %764 = vmatpush1.xpose.msra.mxu0 0.0
    %765 = vmatprep.subr.mxu0 0.0
    %766 = vmatpush1.xpose.msra.mxu0 0.0
    %767 = vmatprep.mubr.f32.mxu0 0.0
    %768 = vmatmul.mubr.f32.gmra.mrb[0].mxu0 %v699
    %v769 = vpop.f32.mrb[0].mxu0
    %v770 = vadd.f32 0.0, %v769
    %v771 = vpop.f32.mrb[0].mxu0
    %772 = vdwg.mxu0
    %773 = vrot.lane.b32.xlu0 %v360, 120
    %v774 = vpop.permute.xlu0 %773
    %776 = vrot.lane.b32.xlu0 %v691, 120
    %v777 = vpop.permute.xlu0 %776
    %v778 = vsel %vm367, %v774, 0
    %v780 = vsel %vm367, %v777, 0
    %782 = vmatprep.subr.mxu0 0.0
    %783 = vmatpush1.xpose.msra.mxu0 %v780
    %784 = vmatprep.subr.mxu0 0.0
    %785 = vmatpush1.xpose.msra.mxu0 0.0
    %786 = vmatprep.subr.mxu0 0.0
    %787 = vmatpush1.xpose.msra.mxu0 0.0
    %788 = vmatprep.subr.mxu0 0.0
    %789 = vmatpush1.xpose.msra.mxu0 0.0
    %790 = vmatprep.subr.mxu0 0.0
    %791 = vmatpush1.xpose.msra.mxu0 0.0
    %792 = vmatprep.subr.mxu0 0.0
    %793 = vmatpush1.xpose.msra.mxu0 0.0
    %794 = vmatprep.subr.mxu0 0.0
    %795 = vmatpush1.xpose.msra.mxu0 0.0
    %796 = vmatprep.subr.mxu0 0.0
    %797 = vmatpush1.xpose.msra.mxu0 0.0
    %798 = vmatprep.subr.mxu0 0.0
    %799 = vmatpush1.xpose.msra.mxu0 0.0
    %800 = vmatprep.subr.mxu0 0.0
    %801 = vmatpush1.xpose.msra.mxu0 0.0
    %802 = vmatprep.subr.mxu0 0.0
    %803 = vmatpush1.xpose.msra.mxu0 0.0
    %804 = vmatprep.subr.mxu0 0.0
    %805 = vmatpush1.xpose.msra.mxu0 0.0
    %806 = vmatprep.subr.mxu0 0.0
    %807 = vmatpush1.xpose.msra.mxu0 0.0
    %808 = vmatprep.subr.mxu0 0.0
    %809 = vmatpush1.xpose.msra.mxu0 0.0
    %810 = vmatprep.subr.mxu0 0.0
    %811 = vmatpush1.xpose.msra.mxu0 0.0
    %812 = vmatprep.subr.mxu0 0.0
    %813 = vmatpush1.xpose.msra.mxu0 0.0
    %814 = vmatprep.subr.mxu0 0.0
    %815 = vmatpush1.xpose.msra.mxu0 0.0
    %816 = vmatprep.subr.mxu0 0.0
    %817 = vmatpush1.xpose.msra.mxu0 0.0
    %818 = vmatprep.subr.mxu0 0.0
    %819 = vmatpush1.xpose.msra.mxu0 0.0
    %820 = vmatprep.subr.mxu0 0.0
    %821 = vmatpush1.xpose.msra.mxu0 0.0
    %822 = vmatprep.subr.mxu0 0.0
    %823 = vmatpush1.xpose.msra.mxu0 0.0
    %824 = vmatprep.subr.mxu0 0.0
    %825 = vmatpush1.xpose.msra.mxu0 0.0
    %826 = vmatprep.subr.mxu0 0.0
    %827 = vmatpush1.xpose.msra.mxu0 0.0
    %828 = vmatprep.subr.mxu0 0.0
    %829 = vmatpush1.xpose.msra.mxu0 0.0
    %830 = vmatprep.subr.mxu0 0.0
    %831 = vmatpush1.xpose.msra.mxu0 0.0
    %832 = vmatprep.subr.mxu0 0.0
    %833 = vmatpush1.xpose.msra.mxu0 0.0
    %834 = vmatprep.subr.mxu0 0.0
    %835 = vmatpush1.xpose.msra.mxu0 0.0
    %836 = vmatprep.subr.mxu0 0.0
    %837 = vmatpush1.xpose.msra.mxu0 0.0
    %838 = vmatprep.subr.mxu0 0.0
    %839 = vmatpush1.xpose.msra.mxu0 0.0
    %840 = vmatprep.subr.mxu0 0.0
    %841 = vmatpush1.xpose.msra.mxu0 0.0
    %842 = vmatprep.subr.mxu0 0.0
    %843 = vmatpush1.xpose.msra.mxu0 0.0
    %844 = vmatprep.subr.mxu0 0.0
    %845 = vmatpush1.xpose.msra.mxu0 0.0
    %846 = vmatprep.mubr.f32.mxu0 0.0
    %847 = vmatmul.mubr.f32.gmra.mrb[0].mxu0 %v778
    %v848 = vpop.f32.mrb[0].mxu0
    %v849 = vadd.f32 0.0, %v848
    %v850 = vpop.f32.mrb[0].mxu0
    %851 = vdwg.mxu0
    %v852 = vsel %vm367, %v770, -inf
    %853 = vmax.xlane.f32.xlu0 %v852
    %v854 = vpop.xlane.xlu0 %853
    %v855 = vsel %vm367, %v849, -inf
    %856 = vmax.xlane.f32.xlu0 %v855
    %v857 = vpop.xlane.xlu0 %856
    %v858 = vsub.f32 %v770, %v854
    %v859 = vsub.f32 %v849, %v857
    %v860 = vmul.f32 %v858, 1.442695
    %v861 = vpow.pop %v860
    %v862 = vmul.f32 %v859, 1.442695
    %v863 = vpow.pop %v862
    %v864 = vsel %vm367, %v861, 0.0
    %865 = vadd.xlane.f32.xlu0 %v864
    %v866 = vpop.xlane.xlu0 %865
    %v867 = vsel %vm367, %v863, 0.0
    %868 = vadd.xlane.f32.xlu0 %v867
    %v869 = vpop.xlane.xlu0 %868
    %v870 = vrcp.pop %v866
    %v871 = vrcp.pop %v869
    %v872 = vmul.f32 %v861, %v870
    %v873 = vmul.f32 %v863, %v871
    %875 = vrot.lane.b32.xlu0 %v692, 120
    %v876 = vpop.permute.xlu0 %875
    %v879 = vsel %vm367, %v872, 0
    %881 = vmatprep.subr.mxu0 0.0
    %882 = vmatpush1.msra.mxu0 %v876
    %883 = vmatprep.subr.mxu0 0.0
    %884 = vmatpush1.msra.mxu0 0.0
    %885 = vmatprep.subr.mxu0 0.0
    %886 = vmatpush1.msra.mxu0 0.0
    %887 = vmatprep.subr.mxu0 0.0
    %888 = vmatpush1.msra.mxu0 0.0
    %889 = vmatprep.subr.mxu0 0.0
    %890 = vmatpush1.msra.mxu0 0.0
    %891 = vmatprep.subr.mxu0 0.0
    %892 = vmatpush1.msra.mxu0 0.0
    %893 = vmatprep.subr.mxu0 0.0
    %894 = vmatpush1.msra.mxu0 0.0
    %895 = vmatprep.subr.mxu0 0.0
    %896 = vmatpush1.msra.mxu0 0.0
    %897 = vmatprep.subr.mxu0 0.0
    %898 = vmatpush1.msra.mxu0 0.0
    %899 = vmatprep.subr.mxu0 0.0
    %900 = vmatpush1.msra.mxu0 0.0
    %901 = vmatprep.subr.mxu0 0.0
    %902 = vmatpush1.msra.mxu0 0.0
    %903 = vmatprep.subr.mxu0 0.0
    %904 = vmatpush1.msra.mxu0 0.0
    %905 = vmatprep.subr.mxu0 0.0
    %906 = vmatpush1.msra.mxu0 0.0
    %907 = vmatprep.subr.mxu0 0.0
    %908 = vmatpush1.msra.mxu0 0.0
    %909 = vmatprep.subr.mxu0 0.0
    %910 = vmatpush1.msra.mxu0 0.0
    %911 = vmatprep.subr.mxu0 0.0
    %912 = vmatpush1.msra.mxu0 0.0
    %913 = vmatprep.subr.mxu0 0.0
    %914 = vmatpush1.msra.mxu0 0.0
    %915 = vmatprep.subr.mxu0 0.0
    %916 = vmatpush1.msra.mxu0 0.0
    %917 = vmatprep.subr.mxu0 0.0
    %918 = vmatpush1.msra.mxu0 0.0
    %919 = vmatprep.subr.mxu0 0.0
    %920 = vmatpush1.msra.mxu0 0.0
    %921 = vmatprep.subr.mxu0 0.0
    %922 = vmatpush1.msra.mxu0 0.0
    %923 = vmatprep.subr.mxu0 0.0
    %924 = vmatpush1.msra.mxu0 0.0
    %925 = vmatprep.subr.mxu0 0.0
    %926 = vmatpush1.msra.mxu0 0.0
    %927 = vmatprep.subr.mxu0 0.0
    %928 = vmatpush1.msra.mxu0 0.0
    %929 = vmatprep.subr.mxu0 0.0
    %930 = vmatpush1.msra.mxu0 0.0
    %931 = vmatprep.subr.mxu0 0.0
    %932 = vmatpush1.msra.mxu0 0.0
    %933 = vmatprep.subr.mxu0 0.0
    %934 = vmatpush1.msra.mxu0 0.0
    %935 = vmatprep.subr.mxu0 0.0
    %936 = vmatpush1.msra.mxu0 0.0
    %937 = vmatprep.subr.mxu0 0.0
    %938 = vmatpush1.msra.mxu0 0.0
    %939 = vmatprep.subr.mxu0 0.0
    %940 = vmatpush1.msra.mxu0 0.0
    %941 = vmatprep.subr.mxu0 0.0
    %942 = vmatpush1.msra.mxu0 0.0
    %943 = vmatprep.subr.mxu0 0.0
    %944 = vmatpush1.msra.mxu0 0.0
    %945 = vmatprep.mubr.f32.mxu0 0.0
    %946 = vmatmul.mubr.f32.gmra.mrb[0].mxu0 %v879
    %v947 = vpop.f32.mrb[0].mxu0
    %v948 = vadd.f32 0.0, %v947
    %v949 = vpop.f32.mrb[0].mxu0
    %950 = vdwg.mxu0
    %952 = vrot.lane.b32.xlu0 %v693, 120
    %v953 = vpop.permute.xlu0 %952
    %v956 = vsel %vm367, %v873, 0
    %958 = vmatprep.subr.mxu0 0.0
    %959 = vmatpush1.msra.mxu0 %v953
    %960 = vmatprep.subr.mxu0 0.0
    %961 = vmatpush1.msra.mxu0 0.0
    %962 = vmatprep.subr.mxu0 0.0
    %963 = vmatpush1.msra.mxu0 0.0
    %964 = vmatprep.subr.mxu0 0.0
    %965 = vmatpush1.msra.mxu0 0.0
    %966 = vmatprep.subr.mxu0 0.0
    %967 = vmatpush1.msra.mxu0 0.0
    %968 = vmatprep.subr.mxu0 0.0
    %969 = vmatpush1.msra.mxu0 0.0
    %970 = vmatprep.subr.mxu0 0.0
    %971 = vmatpush1.msra.mxu0 0.0
    %972 = vmatprep.subr.mxu0 0.0
    %973 = vmatpush1.msra.mxu0 0.0
    %974 = vmatprep.subr.mxu0 0.0
    %975 = vmatpush1.msra.mxu0 0.0
    %976 = vmatprep.subr.mxu0 0.0
    %977 = vmatpush1.msra.mxu0 0.0
    %978 = vmatprep.subr.mxu0 0.0
    %979 = vmatpush1.msra.mxu0 0.0
    %980 = vmatprep.subr.mxu0 0.0
    %981 = vmatpush1.msra.mxu0 0.0
    %982 = vmatprep.subr.mxu0 0.0
    %983 = vmatpush1.msra.mxu0 0.0
    %984 = vmatprep.subr.mxu0 0.0
    %985 = vmatpush1.msra.mxu0 0.0
    %986 = vmatprep.subr.mxu0 0.0
    %987 = vmatpush1.msra.mxu0 0.0
    %988 = vmatprep.subr.mxu0 0.0
    %989 = vmatpush1.msra.mxu0 0.0
    %990 = vmatprep.subr.mxu0 0.0
    %991 = vmatpush1.msra.mxu0 0.0
    %992 = vmatprep.subr.mxu0 0.0
    %993 = vmatpush1.msra.mxu0 0.0
    %994 = vmatprep.subr.mxu0 0.0
    %995 = vmatpush1.msra.mxu0 0.0
    %996 = vmatprep.subr.mxu0 0.0
    %997 = vmatpush1.msra.mxu0 0.0
    %998 = vmatprep.subr.mxu0 0.0
    %999 = vmatpush1.msra.mxu0 0.0
    %1000 = vmatprep.subr.mxu0 0.0
    %1001 = vmatpush1.msra.mxu0 0.0
    %1002 = vmatprep.subr.mxu0 0.0
    %1003 = vmatpush1.msra.mxu0 0.0
    %1004 = vmatprep.subr.mxu0 0.0
    %1005 = vmatpush1.msra.mxu0 0.0
    %1006 = vmatprep.subr.mxu0 0.0
    %1007 = vmatpush1.msra.mxu0 0.0
    %1008 = vmatprep.subr.mxu0 0.0
    %1009 = vmatpush1.msra.mxu0 0.0
    %1010 = vmatprep.subr.mxu0 0.0
    %1011 = vmatpush1.msra.mxu0 0.0
    %1012 = vmatprep.subr.mxu0 0.0
    %1013 = vmatpush1.msra.mxu0 0.0
    %1014 = vmatprep.subr.mxu0 0.0
    %1015 = vmatpush1.msra.mxu0 0.0
    %1016 = vmatprep.subr.mxu0 0.0
    %1017 = vmatpush1.msra.mxu0 0.0
    %1018 = vmatprep.subr.mxu0 0.0
    %1019 = vmatpush1.msra.mxu0 0.0
    %1020 = vmatprep.subr.mxu0 0.0
    %1021 = vmatpush1.msra.mxu0 0.0
    %1022 = vmatprep.mubr.f32.mxu0 0.0
    %1023 = vmatmul.mubr.f32.gmra.mrb[0].mxu0 %v956
    %v1024 = vpop.f32.mrb[0].mxu0
    %v1025 = vadd.f32 0.0, %v1024
    %v1026 = vpop.f32.mrb[0].mxu0
    %1027 = vdwg.mxu0
    %1030 = vrot.lane.b32.xlu0 %v948, 8
    %v1031 = vpop.permute.xlu0 %1030
    %1032 = vrot.lane.b32.xlu0 %v1025, 8
    %v1033 = vpop.permute.xlu0 %1032
    %vm1036 = vcmask 130112
    %1037 = vst.msk [vmem:[#allocation4] sm:$0xff] %vm1036, %v1031
    %1038 = vst.msk [vmem:[#allocation4 + $0x8] sm:$0xff] %vm1036, %v1033
    %v1039 = vld [vmem:[#allocation2] sm:$0xff]
    %v1040 = vld [vmem:[#allocation2 + $0x8] sm:$0xff]
    %v1041 = vld [vmem:[#allocation3] sm:$0xff]
    %v1042 = vld [vmem:[#allocation3 + $0x8] sm:$0xff]
    %1043 = vrot.lane.b32.xlu0 %v355, 112
    %v1044 = vpop.permute.xlu0 %1043
    %1046 = vrot.lane.b32.xlu0 %v1039, 112
    %v1047 = vpop.permute.xlu0 %1046
    %v1048 = vsel %vm367, %v1044, 0
    %v1050 = vsel %vm367, %v1047, 0
    %1052 = vmatprep.subr.mxu0 0.0
    %1053 = vmatpush1.xpose.msra.mxu0 %v1050
    %1054 = vmatprep.subr.mxu0 0.0
    %1055 = vmatpush1.xpose.msra.mxu0 0.0
    %1056 = vmatprep.subr.mxu0 0.0
    %1057 = vmatpush1.xpose.msra.mxu0 0.0
    %1058 = vmatprep.subr.mxu0 0.0
    %1059 = vmatpush1.xpose.msra.mxu0 0.0
    %1060 = vmatprep.subr.mxu0 0.0
    %1061 = vmatpush1.xpose.msra.mxu0 0.0
    %1062 = vmatprep.subr.mxu0 0.0
    %1063 = vmatpush1.xpose.msra.mxu0 0.0
    %1064 = vmatprep.subr.mxu0 0.0
    %1065 = vmatpush1.xpose.msra.mxu0 0.0
    %1066 = vmatprep.subr.mxu0 0.0
    %1067 = vmatpush1.xpose.msra.mxu0 0.0
    %1068 = vmatprep.subr.mxu0 0.0
    %1069 = vmatpush1.xpose.msra.mxu0 0.0
    %1070 = vmatprep.subr.mxu0 0.0
    %1071 = vmatpush1.xpose.msra.mxu0 0.0
    %1072 = vmatprep.subr.mxu0 0.0
    %1073 = vmatpush1.xpose.msra.mxu0 0.0
    %1074 = vmatprep.subr.mxu0 0.0
    %1075 = vmatpush1.xpose.msra.mxu0 0.0
    %1076 = vmatprep.subr.mxu0 0.0
    %1077 = vmatpush1.xpose.msra.mxu0 0.0
    %1078 = vmatprep.subr.mxu0 0.0
    %1079 = vmatpush1.xpose.msra.mxu0 0.0
    %1080 = vmatprep.subr.mxu0 0.0
    %1081 = vmatpush1.xpose.msra.mxu0 0.0
    %1082 = vmatprep.subr.mxu0 0.0
    %1083 = vmatpush1.xpose.msra.mxu0 0.0
    %1084 = vmatprep.subr.mxu0 0.0
    %1085 = vmatpush1.xpose.msra.mxu0 0.0
    %1086 = vmatprep.subr.mxu0 0.0
    %1087 = vmatpush1.xpose.msra.mxu0 0.0
    %1088 = vmatprep.subr.mxu0 0.0
    %1089 = vmatpush1.xpose.msra.mxu0 0.0
    %1090 = vmatprep.subr.mxu0 0.0
    %1091 = vmatpush1.xpose.msra.mxu0 0.0
    %1092 = vmatprep.subr.mxu0 0.0
    %1093 = vmatpush1.xpose.msra.mxu0 0.0
    %1094 = vmatprep.subr.mxu0 0.0
    %1095 = vmatpush1.xpose.msra.mxu0 0.0
    %1096 = vmatprep.subr.mxu0 0.0
    %1097 = vmatpush1.xpose.msra.mxu0 0.0
    %1098 = vmatprep.subr.mxu0 0.0
    %1099 = vmatpush1.xpose.msra.mxu0 0.0
    %1100 = vmatprep.subr.mxu0 0.0
    %1101 = vmatpush1.xpose.msra.mxu0 0.0
    %1102 = vmatprep.subr.mxu0 0.0
    %1103 = vmatpush1.xpose.msra.mxu0 0.0
    %1104 = vmatprep.subr.mxu0 0.0
    %1105 = vmatpush1.xpose.msra.mxu0 0.0
    %1106 = vmatprep.subr.mxu0 0.0
    %1107 = vmatpush1.xpose.msra.mxu0 0.0
    %1108 = vmatprep.subr.mxu0 0.0
    %1109 = vmatpush1.xpose.msra.mxu0 0.0
    %1110 = vmatprep.subr.mxu0 0.0
    %1111 = vmatpush1.xpose.msra.mxu0 0.0
    %1112 = vmatprep.subr.mxu0 0.0
    %1113 = vmatpush1.xpose.msra.mxu0 0.0
    %1114 = vmatprep.subr.mxu0 0.0
    %1115 = vmatpush1.xpose.msra.mxu0 0.0
    %1116 = vmatprep.mubr.f32.mxu0 0.0
    %1117 = vmatmul.mubr.f32.gmra.mrb[0].mxu0 %v1048
    %v1118 = vpop.f32.mrb[0].mxu0
    %v1119 = vadd.f32 0.0, %v1118
    %v1120 = vpop.f32.mrb[0].mxu0
    %1121 = vdwg.mxu0
    %1122 = vrot.lane.b32.xlu0 %v360, 112
    %v1123 = vpop.permute.xlu0 %1122
    %1125 = vrot.lane.b32.xlu0 %v1040, 112
    %v1126 = vpop.permute.xlu0 %1125
    %v1127 = vsel %vm367, %v1123, 0
    %v1129 = vsel %vm367, %v1126, 0
    %1131 = vmatprep.subr.mxu0 0.0
    %1132 = vmatpush1.xpose.msra.mxu0 %v1129
    %1133 = vmatprep.subr.mxu0 0.0
    %1134 = vmatpush1.xpose.msra.mxu0 0.0
    %1135 = vmatprep.subr.mxu0 0.0
    %1136 = vmatpush1.xpose.msra.mxu0 0.0
    %1137 = vmatprep.subr.mxu0 0.0
    %1138 = vmatpush1.xpose.msra.mxu0 0.0
    %1139 = vmatprep.subr.mxu0 0.0
    %1140 = vmatpush1.xpose.msra.mxu0 0.0
    %1141 = vmatprep.subr.mxu0 0.0
    %1142 = vmatpush1.xpose.msra.mxu0 0.0
    %1143 = vmatprep.subr.mxu0 0.0
    %1144 = vmatpush1.xpose.msra.mxu0 0.0
    %1145 = vmatprep.subr.mxu0 0.0
    %1146 = vmatpush1.xpose.msra.mxu0 0.0
    %1147 = vmatprep.subr.mxu0 0.0
    %1148 = vmatpush1.xpose.msra.mxu0 0.0
    %1149 = vmatprep.subr.mxu0 0.0
    %1150 = vmatpush1.xpose.msra.mxu0 0.0
    %1151 = vmatprep.subr.mxu0 0.0
    %1152 = vmatpush1.xpose.msra.mxu0 0.0
    %1153 = vmatprep.subr.mxu0 0.0
    %1154 = vmatpush1.xpose.msra.mxu0 0.0
    %1155 = vmatprep.subr.mxu0 0.0
    %1156 = vmatpush1.xpose.msra.mxu0 0.0
    %1157 = vmatprep.subr.mxu0 0.0
    %1158 = vmatpush1.xpose.msra.mxu0 0.0
    %1159 = vmatprep.subr.mxu0 0.0
    %1160 = vmatpush1.xpose.msra.mxu0 0.0
    %1161 = vmatprep.subr.mxu0 0.0
    %1162 = vmatpush1.xpose.msra.mxu0 0.0
    %1163 = vmatprep.subr.mxu0 0.0
    %1164 = vmatpush1.xpose.msra.mxu0 0.0
    %1165 = vmatprep.subr.mxu0 0.0
    %1166 = vmatpush1.xpose.msra.mxu0 0.0
    %1167 = vmatprep.subr.mxu0 0.0
    %1168 = vmatpush1.xpose.msra.mxu0 0.0
    %1169 = vmatprep.subr.mxu0 0.0
    %1170 = vmatpush1.xpose.msra.mxu0 0.0
    %1171 = vmatprep.subr.mxu0 0.0
    %1172 = vmatpush1.xpose.msra.mxu0 0.0
    %1173 = vmatprep.subr.mxu0 0.0
    %1174 = vmatpush1.xpose.msra.mxu0 0.0
    %1175 = vmatprep.subr.mxu0 0.0
    %1176 = vmatpush1.xpose.msra.mxu0 0.0
    %1177 = vmatprep.subr.mxu0 0.0
    %1178 = vmatpush1.xpose.msra.mxu0 0.0
    %1179 = vmatprep.subr.mxu0 0.0
    %1180 = vmatpush1.xpose.msra.mxu0 0.0
    %1181 = vmatprep.subr.mxu0 0.0
    %1182 = vmatpush1.xpose.msra.mxu0 0.0
    %1183 = vmatprep.subr.mxu0 0.0
    %1184 = vmatpush1.xpose.msra.mxu0 0.0
    %1185 = vmatprep.subr.mxu0 0.0
    %1186 = vmatpush1.xpose.msra.mxu0 0.0
    %1187 = vmatprep.subr.mxu0 0.0
    %1188 = vmatpush1.xpose.msra.mxu0 0.0
    %1189 = vmatprep.subr.mxu0 0.0
    %1190 = vmatpush1.xpose.msra.mxu0 0.0
    %1191 = vmatprep.subr.mxu0 0.0
    %1192 = vmatpush1.xpose.msra.mxu0 0.0
    %1193 = vmatprep.subr.mxu0 0.0
    %1194 = vmatpush1.xpose.msra.mxu0 0.0
    %1195 = vmatprep.mubr.f32.mxu0 0.0
    %1196 = vmatmul.mubr.f32.gmra.mrb[0].mxu0 %v1127
    %v1197 = vpop.f32.mrb[0].mxu0
    %v1198 = vadd.f32 0.0, %v1197
    %v1199 = vpop.f32.mrb[0].mxu0
    %1200 = vdwg.mxu0
    %v1201 = vsel %vm367, %v1119, -inf
    %1202 = vmax.xlane.f32.xlu0 %v1201
    %v1203 = vpop.xlane.xlu0 %1202
    %v1204 = vsel %vm367, %v1198, -inf
    %1205 = vmax.xlane.f32.xlu0 %v1204
    %v1206 = vpop.xlane.xlu0 %1205
    %v1207 = vsub.f32 %v1119, %v1203
    %v1208 = vsub.f32 %v1198, %v1206
    %v1209 = vmul.f32 %v1207, 1.442695
    %v1210 = vpow.pop %v1209
    %v1211 = vmul.f32 %v1208, 1.442695
    %v1212 = vpow.pop %v1211
    %v1213 = vsel %vm367, %v1210, 0.0
    %1214 = vadd.xlane.f32.xlu0 %v1213
    %v1215 = vpop.xlane.xlu0 %1214
    %v1216 = vsel %vm367, %v1212, 0.0
    %1217 = vadd.xlane.f32.xlu0 %v1216
    %v1218 = vpop.xlane.xlu0 %1217
    %v1219 = vrcp.pop %v1215
    %v1220 = vrcp.pop %v1218
    %v1221 = vmul.f32 %v1210, %v1219
    %v1222 = vmul.f32 %v1212, %v1220
    %1224 = vrot.lane.b32.xlu0 %v1041, 112
    %v1225 = vpop.permute.xlu0 %1224
    %v1228 = vsel %vm367, %v1221, 0
    %1230 = vmatprep.subr.mxu0 0.0
    %1231 = vmatpush1.msra.mxu0 %v1225
    %1232 = vmatprep.subr.mxu0 0.0
    %1233 = vmatpush1.msra.mxu0 0.0
    %1234 = vmatprep.subr.mxu0 0.0
    %1235 = vmatpush1.msra.mxu0 0.0
    %1236 = vmatprep.subr.mxu0 0.0
    %1237 = vmatpush1.msra.mxu0 0.0
    %1238 = vmatprep.subr.mxu0 0.0
    %1239 = vmatpush1.msra.mxu0 0.0
    %1240 = vmatprep.subr.mxu0 0.0
    %1241 = vmatpush1.msra.mxu0 0.0
    %1242 = vmatprep.subr.mxu0 0.0
    %1243 = vmatpush1.msra.mxu0 0.0
    %1244 = vmatprep.subr.mxu0 0.0
    %1245 = vmatpush1.msra.mxu0 0.0
    %1246 = vmatprep.subr.mxu0 0.0
    %1247 = vmatpush1.msra.mxu0 0.0
    %1248 = vmatprep.subr.mxu0 0.0
    %1249 = vmatpush1.msra.mxu0 0.0
    %1250 = vmatprep.subr.mxu0 0.0
    %1251 = vmatpush1.msra.mxu0 0.0
    %1252 = vmatprep.subr.mxu0 0.0
    %1253 = vmatpush1.msra.mxu0 0.0
    %1254 = vmatprep.subr.mxu0 0.0
    %1255 = vmatpush1.msra.mxu0 0.0
    %1256 = vmatprep.subr.mxu0 0.0
    %1257 = vmatpush1.msra.mxu0 0.0
    %1258 = vmatprep.subr.mxu0 0.0
    %1259 = vmatpush1.msra.mxu0 0.0
    %1260 = vmatprep.subr.mxu0 0.0
    %1261 = vmatpush1.msra.mxu0 0.0
    %1262 = vmatprep.subr.mxu0 0.0
    %1263 = vmatpush1.msra.mxu0 0.0
    %1264 = vmatprep.subr.mxu0 0.0
    %1265 = vmatpush1.msra.mxu0 0.0
    %1266 = vmatprep.subr.mxu0 0.0
    %1267 = vmatpush1.msra.mxu0 0.0
    %1268 = vmatprep.subr.mxu0 0.0
    %1269 = vmatpush1.msra.mxu0 0.0
    %1270 = vmatprep.subr.mxu0 0.0
    %1271 = vmatpush1.msra.mxu0 0.0
    %1272 = vmatprep.subr.mxu0 0.0
    %1273 = vmatpush1.msra.mxu0 0.0
    %1274 = vmatprep.subr.mxu0 0.0
    %1275 = vmatpush1.msra.mxu0 0.0
    %1276 = vmatprep.subr.mxu0 0.0
    %1277 = vmatpush1.msra.mxu0 0.0
    %1278 = vmatprep.subr.mxu0 0.0
    %1279 = vmatpush1.msra.mxu0 0.0
    %1280 = vmatprep.subr.mxu0 0.0
    %1281 = vmatpush1.msra.mxu0 0.0
    %1282 = vmatprep.subr.mxu0 0.0
    %1283 = vmatpush1.msra.mxu0 0.0
    %1284 = vmatprep.subr.mxu0 0.0
    %1285 = vmatpush1.msra.mxu0 0.0
    %1286 = vmatprep.subr.mxu0 0.0
    %1287 = vmatpush1.msra.mxu0 0.0
    %1288 = vmatprep.subr.mxu0 0.0
    %1289 = vmatpush1.msra.mxu0 0.0
    %1290 = vmatprep.subr.mxu0 0.0
    %1291 = vmatpush1.msra.mxu0 0.0
    %1292 = vmatprep.subr.mxu0 0.0
    %1293 = vmatpush1.msra.mxu0 0.0
    %1294 = vmatprep.mubr.f32.mxu0 0.0
    %1295 = vmatmul.mubr.f32.gmra.mrb[0].mxu0 %v1228
    %v1296 = vpop.f32.mrb[0].mxu0
    %v1297 = vadd.f32 0.0, %v1296
    %v1298 = vpop.f32.mrb[0].mxu0
    %1299 = vdwg.mxu0
    %1301 = vrot.lane.b32.xlu0 %v1042, 112
    %v1302 = vpop.permute.xlu0 %1301
    %v1305 = vsel %vm367, %v1222, 0
    %1307 = vmatprep.subr.mxu0 0.0
    %1308 = vmatpush1.msra.mxu0 %v1302
    %1309 = vmatprep.subr.mxu0 0.0
    %1310 = vmatpush1.msra.mxu0 0.0
    %1311 = vmatprep.subr.mxu0 0.0
    %1312 = vmatpush1.msra.mxu0 0.0
    %1313 = vmatprep.subr.mxu0 0.0
    %1314 = vmatpush1.msra.mxu0 0.0
    %1315 = vmatprep.subr.mxu0 0.0
    %1316 = vmatpush1.msra.mxu0 0.0
    %1317 = vmatprep.subr.mxu0 0.0
    %1318 = vmatpush1.msra.mxu0 0.0
    %1319 = vmatprep.subr.mxu0 0.0
    %1320 = vmatpush1.msra.mxu0 0.0
    %1321 = vmatprep.subr.mxu0 0.0
    %1322 = vmatpush1.msra.mxu0 0.0
    %1323 = vmatprep.subr.mxu0 0.0
    %1324 = vmatpush1.msra.mxu0 0.0
    %1325 = vmatprep.subr.mxu0 0.0
    %1326 = vmatpush1.msra.mxu0 0.0
    %1327 = vmatprep.subr.mxu0 0.0
    %1328 = vmatpush1.msra.mxu0 0.0
    %1329 = vmatprep.subr.mxu0 0.0
    %1330 = vmatpush1.msra.mxu0 0.0
    %1331 = vmatprep.subr.mxu0 0.0
    %1332 = vmatpush1.msra.mxu0 0.0
    %1333 = vmatprep.subr.mxu0 0.0
    %1334 = vmatpush1.msra.mxu0 0.0
    %1335 = vmatprep.subr.mxu0 0.0
    %1336 = vmatpush1.msra.mxu0 0.0
    %1337 = vmatprep.subr.mxu0 0.0
    %1338 = vmatpush1.msra.mxu0 0.0
    %1339 = vmatprep.subr.mxu0 0.0
    %1340 = vmatpush1.msra.mxu0 0.0
    %1341 = vmatprep.subr.mxu0 0.0
    %1342 = vmatpush1.msra.mxu0 0.0
    %1343 = vmatprep.subr.mxu0 0.0
    %1344 = vmatpush1.msra.mxu0 0.0
    %1345 = vmatprep.subr.mxu0 0.0
    %1346 = vmatpush1.msra.mxu0 0.0
    %1347 = vmatprep.subr.mxu0 0.0
    %1348 = vmatpush1.msra.mxu0 0.0
    %1349 = vmatprep.subr.mxu0 0.0
    %1350 = vmatpush1.msra.mxu0 0.0
    %1351 = vmatprep.subr.mxu0 0.0
    %1352 = vmatpush1.msra.mxu0 0.0
    %1353 = vmatprep.subr.mxu0 0.0
    %1354 = vmatpush1.msra.mxu0 0.0
    %1355 = vmatprep.subr.mxu0 0.0
    %1356 = vmatpush1.msra.mxu0 0.0
    %1357 = vmatprep.subr.mxu0 0.0
    %1358 = vmatpush1.msra.mxu0 0.0
    %1359 = vmatprep.subr.mxu0 0.0
    %1360 = vmatpush1.msra.mxu0 0.0
    %1361 = vmatprep.subr.mxu0 0.0
    %1362 = vmatpush1.msra.mxu0 0.0
    %1363 = vmatprep.subr.mxu0 0.0
    %1364 = vmatpush1.msra.mxu0 0.0
    %1365 = vmatprep.subr.mxu0 0.0
    %1366 = vmatpush1.msra.mxu0 0.0
    %1367 = vmatprep.subr.mxu0 0.0
    %1368 = vmatpush1.msra.mxu0 0.0
    %1369 = vmatprep.subr.mxu0 0.0
    %1370 = vmatpush1.msra.mxu0 0.0
    %1371 = vmatprep.mubr.f32.mxu0 0.0
    %1372 = vmatmul.mubr.f32.gmra.mrb[0].mxu0 %v1305
    %v1373 = vpop.f32.mrb[0].mxu0
    %v1374 = vadd.f32 0.0, %v1373
    %v1375 = vpop.f32.mrb[0].mxu0
    %1376 = vdwg.mxu0
    %1379 = vrot.lane.b32.xlu0 %v1297, 16
    %v1380 = vpop.permute.xlu0 %1379
    %1381 = vrot.lane.b32.xlu0 %v1374, 16
    %v1382 = vpop.permute.xlu0 %1381
    %vm1385 = vcmask 195712
    %1386 = vst.msk [vmem:[#allocation4] sm:$0xff] %vm1385, %v1380
    %1387 = vst.msk [vmem:[#allocation4 + $0x8] sm:$0xff] %vm1385, %v1382
    %v1388 = vld [vmem:[#allocation2] sm:$0xff]
    %v1389 = vld [vmem:[#allocation2 + $0x8] sm:$0xff]
    %v1390 = vld [vmem:[#allocation3] sm:$0xff]
    %v1391 = vld [vmem:[#allocation3 + $0x8] sm:$0xff]
    %1392 = vrot.lane.b32.xlu0 %v355, 104
    %v1393 = vpop.permute.xlu0 %1392
    %1395 = vrot.lane.b32.xlu0 %v1388, 104
    %v1396 = vpop.permute.xlu0 %1395
    %v1397 = vsel %vm367, %v1393, 0
    %v1399 = vsel %vm367, %v1396, 0
    %1401 = vmatprep.subr.mxu0 0.0
    %1402 = vmatpush1.xpose.msra.mxu0 %v1399
    %1403 = vmatprep.subr.mxu0 0.0
    %1404 = vmatpush1.xpose.msra.mxu0 0.0
    %1405 = vmatprep.subr.mxu0 0.0
    %1406 = vmatpush1.xpose.msra.mxu0 0.0
    %1407 = vmatprep.subr.mxu0 0.0
    %1408 = vmatpush1.xpose.msra.mxu0 0.0
    %1409 = vmatprep.subr.mxu0 0.0
    %1410 = vmatpush1.xpose.msra.mxu0 0.0
    %1411 = vmatprep.subr.mxu0 0.0
    %1412 = vmatpush1.xpose.msra.mxu0 0.0
    %1413 = vmatprep.subr.mxu0 0.0
    %1414 = vmatpush1.xpose.msra.mxu0 0.0
    %1415 = vmatprep.subr.mxu0 0.0
    %1416 = vmatpush1.xpose.msra.mxu0 0.0
    %1417 = vmatprep.subr.mxu0 0.0
    %1418 = vmatpush1.xpose.msra.mxu0 0.0
    %1419 = vmatprep.subr.mxu0 0.0
    %1420 = vmatpush1.xpose.msra.mxu0 0.0
    %1421 = vmatprep.subr.mxu0 0.0
    %1422 = vmatpush1.xpose.msra.mxu0 0.0
    %1423 = vmatprep.subr.mxu0 0.0
    %1424 = vmatpush1.xpose.msra.mxu0 0.0
    %1425 = vmatprep.subr.mxu0 0.0
    %1426 = vmatpush1.xpose.msra.mxu0 0.0
    %1427 = vmatprep.subr.mxu0 0.0
    %1428 = vmatpush1.xpose.msra.mxu0 0.0
    %1429 = vmatprep.subr.mxu0 0.0
    %1430 = vmatpush1.xpose.msra.mxu0 0.0
    %1431 = vmatprep.subr.mxu0 0.0
    %1432 = vmatpush1.xpose.msra.mxu0 0.0
    %1433 = vmatprep.subr.mxu0 0.0
    %1434 = vmatpush1.xpose.msra.mxu0 0.0
    %1435 = vmatprep.subr.mxu0 0.0
    %1436 = vmatpush1.xpose.msra.mxu0 0.0
    %1437 = vmatprep.subr.mxu0 0.0
    %1438 = vmatpush1.xpose.msra.mxu0 0.0
    %1439 = vmatprep.subr.mxu0 0.0
    %1440 = vmatpush1.xpose.msra.mxu0 0.0
    %1441 = vmatprep.subr.mxu0 0.0
    %1442 = vmatpush1.xpose.msra.mxu0 0.0
    %1443 = vmatprep.subr.mxu0 0.0
    %1444 = vmatpush1.xpose.msra.mxu0 0.0
    %1445 = vmatprep.subr.mxu0 0.0
    %1446 = vmatpush1.xpose.msra.mxu0 0.0
    %1447 = vmatprep.subr.mxu0 0.0
    %1448 = vmatpush1.xpose.msra.mxu0 0.0
    %1449 = vmatprep.subr.mxu0 0.0
    %1450 = vmatpush1.xpose.msra.mxu0 0.0
    %1451 = vmatprep.subr.mxu0 0.0
    %1452 = vmatpush1.xpose.msra.mxu0 0.0
    %1453 = vmatprep.subr.mxu0 0.0
    %1454 = vmatpush1.xpose.msra.mxu0 0.0
    %1455 = vmatprep.subr.mxu0 0.0
    %1456 = vmatpush1.xpose.msra.mxu0 0.0
    %1457 = vmatprep.subr.mxu0 0.0
    %1458 = vmatpush1.xpose.msra.mxu0 0.0
    %1459 = vmatprep.subr.mxu0 0.0
    %1460 = vmatpush1.xpose.msra.mxu0 0.0
    %1461 = vmatprep.subr.mxu0 0.0
    %1462 = vmatpush1.xpose.msra.mxu0 0.0
    %1463 = vmatprep.subr.mxu0 0.0
    %1464 = vmatpush1.xpose.msra.mxu0 0.0
    %1465 = vmatprep.mubr.f32.mxu0 0.0
    %1466 = vmatmul.mubr.f32.gmra.mrb[0].mxu0 %v1397
    %v1467 = vpop.f32.mrb[0].mxu0
    %v1468 = vadd.f32 0.0, %v1467
    %v1469 = vpop.f32.mrb[0].mxu0
    %1470 = vdwg.mxu0
    %1471 = vrot.lane.b32.xlu0 %v360, 104
    %v1472 = vpop.permute.xlu0 %1471
    %1474 = vrot.lane.b32.xlu0 %v1389, 104
    %v1475 = vpop.permute.xlu0 %1474
    %v1476 = vsel %vm367, %v1472, 0
    %v1478 = vsel %vm367, %v1475, 0
    %1480 = vmatprep.subr.mxu0 0.0
    %1481 = vmatpush1.xpose.msra.mxu0 %v1478
    %1482 = vmatprep.subr.mxu0 0.0
    %1483 = vmatpush1.xpose.msra.mxu0 0.0
    %1484 = vmatprep.subr.mxu0 0.0
    %1485 = vmatpush1.xpose.msra.mxu0 0.0
    %1486 = vmatprep.subr.mxu0 0.0
    %1487 = vmatpush1.xpose.msra.mxu0 0.0
    %1488 = vmatprep.subr.mxu0 0.0
    %1489 = vmatpush1.xpose.msra.mxu0 0.0
    %1490 = vmatprep.subr.mxu0 0.0
    %1491 = vmatpush1.xpose.msra.mxu0 0.0
    %1492 = vmatprep.subr.mxu0 0.0
    %1493 = vmatpush1.xpose.msra.mxu0 0.0
    %1494 = vmatprep.subr.mxu0 0.0
    %1495 = vmatpush1.xpose.msra.mxu0 0.0
    %1496 = vmatprep.subr.mxu0 0.0
    %1497 = vmatpush1.xpose.msra.mxu0 0.0
    %1498 = vmatprep.subr.mxu0 0.0
    %1499 = vmatpush1.xpose.msra.mxu0 0.0
    %1500 = vmatprep.subr.mxu0 0.0
    %1501 = vmatpush1.xpose.msra.mxu0 0.0
    %1502 = vmatprep.subr.mxu0 0.0
    %1503 = vmatpush1.xpose.msra.mxu0 0.0
    %1504 = vmatprep.subr.mxu0 0.0
    %1505 = vmatpush1.xpose.msra.mxu0 0.0
    %1506 = vmatprep.subr.mxu0 0.0
    %1507 = vmatpush1.xpose.msra.mxu0 0.0
    %1508 = vmatprep.subr.mxu0 0.0
    %1509 = vmatpush1.xpose.msra.mxu0 0.0
    %1510 = vmatprep.subr.mxu0 0.0
    %1511 = vmatpush1.xpose.msra.mxu0 0.0
    %1512 = vmatprep.subr.mxu0 0.0
    %1513 = vmatpush1.xpose.msra.mxu0 0.0
    %1514 = vmatprep.subr.mxu0 0.0
    %1515 = vmatpush1.xpose.msra.mxu0 0.0
    %1516 = vmatprep.subr.mxu0 0.0
    %1517 = vmatpush1.xpose.msra.mxu0 0.0
    %1518 = vmatprep.subr.mxu0 0.0
    %1519 = vmatpush1.xpose.msra.mxu0 0.0
    %1520 = vmatprep.subr.mxu0 0.0
    %1521 = vmatpush1.xpose.msra.mxu0 0.0
    %1522 = vmatprep.subr.mxu0 0.0
    %1523 = vmatpush1.xpose.msra.mxu0 0.0
    %1524 = vmatprep.subr.mxu0 0.0
    %1525 = vmatpush1.xpose.msra.mxu0 0.0
    %1526 = vmatprep.subr.mxu0 0.0
    %1527 = vmatpush1.xpose.msra.mxu0 0.0
    %1528 = vmatprep.subr.mxu0 0.0
    %1529 = vmatpush1.xpose.msra.mxu0 0.0
    %1530 = vmatprep.subr.mxu0 0.0
    %1531 = vmatpush1.xpose.msra.mxu0 0.0
    %1532 = vmatprep.subr.mxu0 0.0
    %1533 = vmatpush1.xpose.msra.mxu0 0.0
    %1534 = vmatprep.subr.mxu0 0.0
    %1535 = vmatpush1.xpose.msra.mxu0 0.0
    %1536 = vmatprep.subr.mxu0 0.0
    %1537 = vmatpush1.xpose.msra.mxu0 0.0
    %1538 = vmatprep.subr.mxu0 0.0
    %1539 = vmatpush1.xpose.msra.mxu0 0.0
    %1540 = vmatprep.subr.mxu0 0.0
    %1541 = vmatpush1.xpose.msra.mxu0 0.0
    %1542 = vmatprep.subr.mxu0 0.0
    %1543 = vmatpush1.xpose.msra.mxu0 0.0
    %1544 = vmatprep.mubr.f32.mxu0 0.0
    %1545 = vmatmul.mubr.f32.gmra.mrb[0].mxu0 %v1476
    %v1546 = vpop.f32.mrb[0].mxu0
    %v1547 = vadd.f32 0.0, %v1546
    %v1548 = vpop.f32.mrb[0].mxu0
    %1549 = vdwg.mxu0
    %v1550 = vsel %vm367, %v1468, -inf
    %1551 = vmax.xlane.f32.xlu0 %v1550
    %v1552 = vpop.xlane.xlu0 %1551
    %v1553 = vsel %vm367, %v1547, -inf
    %1554 = vmax.xlane.f32.xlu0 %v1553
    %v1555 = vpop.xlane.xlu0 %1554
    %v1556 = vsub.f32 %v1468, %v1552
    %v1557 = vsub.f32 %v1547, %v1555
    %v1558 = vmul.f32 %v1556, 1.442695
    %v1559 = vpow.pop %v1558
    %v1560 = vmul.f32 %v1557, 1.442695
    %v1561 = vpow.pop %v1560
    %v1562 = vsel %vm367, %v1559, 0.0
    %1563 = vadd.xlane.f32.xlu0 %v1562
    %v1564 = vpop.xlane.xlu0 %1563
    %v1565 = vsel %vm367, %v1561, 0.0
    %1566 = vadd.xlane.f32.xlu0 %v1565
    %v1567 = vpop.xlane.xlu0 %1566
    %v1568 = vrcp.pop %v1564
    %v1569 = vrcp.pop %v1567
    %v1570 = vmul.f32 %v1559, %v1568
    %v1571 = vmul.f32 %v1561, %v1569
    %1573 = vrot.lane.b32.xlu0 %v1390, 104
    %v1574 = vpop.permute.xlu0 %1573
    %v1577 = vsel %vm367, %v1570, 0
    %1579 = vmatprep.subr.mxu0 0.0
    %1580 = vmatpush1.msra.mxu0 %v1574
    %1581 = vmatprep.subr.mxu0 0.0
    %1582 = vmatpush1.msra.mxu0 0.0
    %1583 = vmatprep.subr.mxu0 0.0
    %1584 = vmatpush1.msra.mxu0 0.0
    %1585 = vmatprep.subr.mxu0 0.0
    %1586 = vmatpush1.msra.mxu0 0.0
    %1587 = vmatprep.subr.mxu0 0.0
    %1588 = vmatpush1.msra.mxu0 0.0
    %1589 = vmatprep.subr.mxu0 0.0
    %1590 = vmatpush1.msra.mxu0 0.0
    %1591 = vmatprep.subr.mxu0 0.0
    %1592 = vmatpush1.msra.mxu0 0.0
    %1593 = vmatprep.subr.mxu0 0.0
    %1594 = vmatpush1.msra.mxu0 0.0
    %1595 = vmatprep.subr.mxu0 0.0
    %1596 = vmatpush1.msra.mxu0 0.0
    %1597 = vmatprep.subr.mxu0 0.0
    %1598 = vmatpush1.msra.mxu0 0.0
    %1599 = vmatprep.subr.mxu0 0.0
    %1600 = vmatpush1.msra.mxu0 0.0
    %1601 = vmatprep.subr.mxu0 0.0
    %1602 = vmatpush1.msra.mxu0 0.0
    %1603 = vmatprep.subr.mxu0 0.0
    %1604 = vmatpush1.msra.mxu0 0.0
    %1605 = vmatprep.subr.mxu0 0.0
    %1606 = vmatpush1.msra.mxu0 0.0
    %1607 = vmatprep.subr.mxu0 0.0
    %1608 = vmatpush1.msra.mxu0 0.0
    %1609 = vmatprep.subr.mxu0 0.0
    %1610 = vmatpush1.msra.mxu0 0.0
    %1611 = vmatprep.subr.mxu0 0.0
    %1612 = vmatpush1.msra.mxu0 0.0
    %1613 = vmatprep.subr.mxu0 0.0
    %1614 = vmatpush1.msra.mxu0 0.0
    %1615 = vmatprep.subr.mxu0 0.0
    %1616 = vmatpush1.msra.mxu0 0.0
    %1617 = vmatprep.subr.mxu0 0.0
    %1618 = vmatpush1.msra.mxu0 0.0
    %1619 = vmatprep.subr.mxu0 0.0
    %1620 = vmatpush1.msra.mxu0 0.0
    %1621 = vmatprep.subr.mxu0 0.0
    %1622 = vmatpush1.msra.mxu0 0.0
    %1623 = vmatprep.subr.mxu0 0.0
    %1624 = vmatpush1.msra.mxu0 0.0
    %1625 = vmatprep.subr.mxu0 0.0
    %1626 = vmatpush1.msra.mxu0 0.0
    %1627 = vmatprep.subr.mxu0 0.0
    %1628 = vmatpush1.msra.mxu0 0.0
    %1629 = vmatprep.subr.mxu0 0.0
    %1630 = vmatpush1.msra.mxu0 0.0
    %1631 = vmatprep.subr.mxu0 0.0
    %1632 = vmatpush1.msra.mxu0 0.0
    %1633 = vmatprep.subr.mxu0 0.0
    %1634 = vmatpush1.msra.mxu0 0.0
    %1635 = vmatprep.subr.mxu0 0.0
    %1636 = vmatpush1.msra.mxu0 0.0
    %1637 = vmatprep.subr.mxu0 0.0
    %1638 = vmatpush1.msra.mxu0 0.0
    %1639 = vmatprep.subr.mxu0 0.0
    %1640 = vmatpush1.msra.mxu0 0.0
    %1641 = vmatprep.subr.mxu0 0.0
    %1642 = vmatpush1.msra.mxu0 0.0
    %1643 = vmatprep.mubr.f32.mxu0 0.0
    %1644 = vmatmul.mubr.f32.gmra.mrb[0].mxu0 %v1577
    %v1645 = vpop.f32.mrb[0].mxu0
    %v1646 = vadd.f32 0.0, %v1645
    %v1647 = vpop.f32.mrb[0].mxu0
    %1648 = vdwg.mxu0
    %1650 = vrot.lane.b32.xlu0 %v1391, 104
    %v1651 = vpop.permute.xlu0 %1650
    %v1654 = vsel %vm367, %v1571, 0
    %1656 = vmatprep.subr.mxu0 0.0
    %1657 = vmatpush1.msra.mxu0 %v1651
    %1658 = vmatprep.subr.mxu0 0.0
    %1659 = vmatpush1.msra.mxu0 0.0
    %1660 = vmatprep.subr.mxu0 0.0
    %1661 = vmatpush1.msra.mxu0 0.0
    %1662 = vmatprep.subr.mxu0 0.0
    %1663 = vmatpush1.msra.mxu0 0.0
    %1664 = vmatprep.subr.mxu0 0.0
    %1665 = vmatpush1.msra.mxu0 0.0
    %1666 = vmatprep.subr.mxu0 0.0
    %1667 = vmatpush1.msra.mxu0 0.0
    %1668 = vmatprep.subr.mxu0 0.0
    %1669 = vmatpush1.msra.mxu0 0.0
    %1670 = vmatprep.subr.mxu0 0.0
    %1671 = vmatpush1.msra.mxu0 0.0
    %1672 = vmatprep.subr.mxu0 0.0
    %1673 = vmatpush1.msra.mxu0 0.0
    %1674 = vmatprep.subr.mxu0 0.0
    %1675 = vmatpush1.msra.mxu0 0.0
    %1676 = vmatprep.subr.mxu0 0.0
    %1677 = vmatpush1.msra.mxu0 0.0
    %1678 = vmatprep.subr.mxu0 0.0
    %1679 = vmatpush1.msra.mxu0 0.0
    %1680 = vmatprep.subr.mxu0 0.0
    %1681 = vmatpush1.msra.mxu0 0.0
    %1682 = vmatprep.subr.mxu0 0.0
    %1683 = vmatpush1.msra.mxu0 0.0
    %1684 = vmatprep.subr.mxu0 0.0
    %1685 = vmatpush1.msra.mxu0 0.0
    %1686 = vmatprep.subr.mxu0 0.0
    %1687 = vmatpush1.msra.mxu0 0.0
    %1688 = vmatprep.subr.mxu0 0.0
    %1689 = vmatpush1.msra.mxu0 0.0
    %1690 = vmatprep.subr.mxu0 0.0
    %1691 = vmatpush1.msra.mxu0 0.0
    %1692 = vmatprep.subr.mxu0 0.0
    %1693 = vmatpush1.msra.mxu0 0.0
    %1694 = vmatprep.subr.mxu0 0.0
    %1695 = vmatpush1.msra.mxu0 0.0
    %1696 = vmatprep.subr.mxu0 0.0
    %1697 = vmatpush1.msra.mxu0 0.0
    %1698 = vmatprep.subr.mxu0 0.0
    %1699 = vmatpush1.msra.mxu0 0.0
    %1700 = vmatprep.subr.mxu0 0.0
    %1701 = vmatpush1.msra.mxu0 0.0
    %1702 = vmatprep.subr.mxu0 0.0
    %1703 = vmatpush1.msra.mxu0 0.0
    %1704 = vmatprep.subr.mxu0 0.0
    %1705 = vmatpush1.msra.mxu0 0.0
    %1706 = vmatprep.subr.mxu0 0.0
    %1707 = vmatpush1.msra.mxu0 0.0
    %1708 = vmatprep.subr.mxu0 0.0
    %1709 = vmatpush1.msra.mxu0 0.0
    %1710 = vmatprep.subr.mxu0 0.0
    %1711 = vmatpush1.msra.mxu0 0.0
    %1712 = vmatprep.subr.mxu0 0.0
    %1713 = vmatpush1.msra.mxu0 0.0
    %1714 = vmatprep.subr.mxu0 0.0
    %1715 = vmatpush1.msra.mxu0 0.0
    %1716 = vmatprep.subr.mxu0 0.0
    %1717 = vmatpush1.msra.mxu0 0.0
    %1718 = vmatprep.subr.mxu0 0.0
    %1719 = vmatpush1.msra.mxu0 0.0
    %1720 = vmatprep.mubr.f32.mxu0 0.0
    %1721 = vmatmul.mubr.f32.gmra.mrb[0].mxu0 %v1654
    %v1722 = vpop.f32.mrb[0].mxu0
    %v1723 = vadd.f32 0.0, %v1722
    %v1724 = vpop.f32.mrb[0].mxu0
    %1725 = vdwg.mxu0
    %1728 = vrot.lane.b32.xlu0 %v1646, 24
    %v1729 = vpop.permute.xlu0 %1728
    %1730 = vrot.lane.b32.xlu0 %v1723, 24
    %v1731 = vpop.permute.xlu0 %1730
    %vm1734 = vcmask 261312
    %1735 = vst.msk [vmem:[#allocation4] sm:$0xff] %vm1734, %v1729
    %1736 = vst.msk [vmem:[#allocation4 + $0x8] sm:$0xff] %vm1734, %v1731
    %v1737 = vld [vmem:[#allocation4] sm:$0xff]
    %v1738 = vld [vmem:[#allocation4 + $0x8] sm:$0xff]
    %v1739 = vld [vmem:[#allocation14] sm:$0xff]
    %v1740 = vld [vmem:[#allocation14 + $0x8] sm:$0xff]
    %v1741 = vld [vmem:[#allocation14 + $0x10] sm:$0xff]
    %v1742 = vld [vmem:[#allocation14 + $0x18] sm:$0xff]
    %vm1743 = vcmask 261120
    %v1745 = vsel %vm1743, %v1737, 0
    %v1748 = vsel %vm1743, %v1738, 0
    %1750 = vmatprep.subr.mxu0 0.0
    %1751 = vmatpush1.msra.mxu0 %v1739
    %1752 = vmatprep.subr.mxu0 0.0
    %1753 = vmatpush1.msra.mxu0 %v1740
    %1754 = vmatprep.subr.mxu0 0.0
    %1755 = vmatpush1.msra.mxu0 %v1741
    %1756 = vmatprep.subr.mxu0 0.0
    %1757 = vmatpush1.msra.mxu0 %v1742
    %1758 = vmatprep.subr.mxu0 0.0
    %1759 = vmatpush1.msra.mxu0 0.0
    %1760 = vmatprep.subr.mxu0 0.0
    %1761 = vmatpush1.msra.mxu0 0.0
    %1762 = vmatprep.subr.mxu0 0.0
    %1763 = vmatpush1.msra.mxu0 0.0
    %1764 = vmatprep.subr.mxu0 0.0
    %1765 = vmatpush1.msra.mxu0 0.0
    %1766 = vmatprep.subr.mxu0 0.0
    %1767 = vmatpush1.msra.mxu0 0.0
    %1768 = vmatprep.subr.mxu0 0.0
    %1769 = vmatpush1.msra.mxu0 0.0
    %1770 = vmatprep.subr.mxu0 0.0
    %1771 = vmatpush1.msra.mxu0 0.0
    %1772 = vmatprep.subr.mxu0 0.0
    %1773 = vmatpush1.msra.mxu0 0.0
    %1774 = vmatprep.subr.mxu0 0.0
    %1775 = vmatpush1.msra.mxu0 0.0
    %1776 = vmatprep.subr.mxu0 0.0
    %1777 = vmatpush1.msra.mxu0 0.0
    %1778 = vmatprep.subr.mxu0 0.0
    %1779 = vmatpush1.msra.mxu0 0.0
    %1780 = vmatprep.subr.mxu0 0.0
    %1781 = vmatpush1.msra.mxu0 0.0
    %1782 = vmatprep.subr.mxu0 0.0
    %1783 = vmatpush1.msra.mxu0 0.0
    %1784 = vmatprep.subr.mxu0 0.0
    %1785 = vmatpush1.msra.mxu0 0.0
    %1786 = vmatprep.subr.mxu0 0.0
    %1787 = vmatpush1.msra.mxu0 0.0
    %1788 = vmatprep.subr.mxu0 0.0
    %1789 = vmatpush1.msra.mxu0 0.0
    %1790 = vmatprep.subr.mxu0 0.0
    %1791 = vmatpush1.msra.mxu0 0.0
    %1792 = vmatprep.subr.mxu0 0.0
    %1793 = vmatpush1.msra.mxu0 0.0
    %1794 = vmatprep.subr.mxu0 0.0
    %1795 = vmatpush1.msra.mxu0 0.0
    %1796 = vmatprep.subr.mxu0 0.0
    %1797 = vmatpush1.msra.mxu0 0.0
    %1798 = vmatprep.subr.mxu0 0.0
    %1799 = vmatpush1.msra.mxu0 0.0
    %1800 = vmatprep.subr.mxu0 0.0
    %1801 = vmatpush1.msra.mxu0 0.0
    %1802 = vmatprep.subr.mxu0 0.0
    %1803 = vmatpush1.msra.mxu0 0.0
    %1804 = vmatprep.subr.mxu0 0.0
    %1805 = vmatpush1.msra.mxu0 0.0
    %1806 = vmatprep.subr.mxu0 0.0
    %1807 = vmatpush1.msra.mxu0 0.0
    %1808 = vmatprep.subr.mxu0 0.0
    %1809 = vmatpush1.msra.mxu0 0.0
    %1810 = vmatprep.subr.mxu0 0.0
    %1811 = vmatpush1.msra.mxu0 0.0
    %1812 = vmatprep.subr.mxu0 0.0
    %1813 = vmatpush1.msra.mxu0 0.0
    %1814 = vmatprep.mubr.f32.mxu0 0.0
    %1815 = vmatmul.mubr.f32.gmra.mrb[0].mxu0 %v1745
    %v1816 = vpop.f32.mrb[0].mxu0
    %v1817 = vadd.f32 0.0, %v1816
    %v1818 = vpop.f32.mrb[0].mxu0
    %1819 = vmatprep.mubr.f32.mxu0 0.0
    %1820 = vmatmul.mubr.f32.gmra.mrb[0].mxu0 %v1748
    %v1821 = vpop.f32.mrb[0].mxu0
    %v1822 = vadd.f32 0.0, %v1821
    %v1823 = vpop.f32.mrb[0].mxu0
    %1824 = vdwg.mxu0
    %1825 = vst [vmem:[#allocation16] sm:$0xff] %v1817
    %1826 = vst [vmem:[#allocation16 + $0x8] sm:$0xff] %v1822
    // Predicated region
    $region54: #{tpu_custom_call.1} parent=1 // pred_check
      _
    $region55: #{tpu_custom_call.1} parent=1 // pred_check_branch
      %1828 = sbr.rel (0) target = $region57
    $region56: #{tpu_custom_call.1} parent=1 // pred_region
      %s1830 = ssub.s32 256, 256
      %1831 = vsyncadd [#allocation7], %s1830
      %s1832 = sshll.u32 [#allocation16], 4
      %s1833 = int_to_ptr.vmem [resolvable:$true] %s1832
      %1838 = dma.vmem_to_hbm [thread:$0]  %s1833, 256, %s6, [#allocation7], 128, 128, 8
    $region57: #{tpu_custom_call.1} parent=1 // pred_fallthru
      _
    // Predicated region
    $region58: #{tpu_custom_call.1} parent=1 // pred_check
      _
    $region59: #{tpu_custom_call.1} parent=1 // pred_check_branch
      %1840 = sbr.rel (0) target = $region61
    $region60: #{tpu_custom_call.1} parent=1 // pred_region
      %1841 = dma.done [#allocation7], 256
    $region61: #{tpu_custom_call.1} parent=1 // pred_fallthru
      _
    %1842 = vsyncpa [#allocation6], 1
    %1843 = vsyncpa [#allocation9], 1
    %1844 = vsyncpa [#allocation12], 1
    %1845 = vsyncpa [#allocation15], 1
    %1846 = vsyncpa [#allocation7], 1

</llo_original>
